<compile_context>
chip_gen: v7x
topology: tpu7x:2x2x1
jax: 0.10.0
libtpu: 0.0.40
codegen_flags: <defaults>
</compile_context>

<pallas_src>
import functools

import jax
import jax.numpy as jnp
from jax import lax
from jax.experimental import pallas as pl
from jax.experimental.pallas import tpu as pltpu

LN_EPS = 1e-5


# ---------------------------------------------------------------------------
# Fused kernel: self-attention (q = k = v) + residual + LayerNorm
# ---------------------------------------------------------------------------
def _fused_kernel(x_ref, g_ref, b_ref, o_ref, *, num_heads):
    """x_ref, o_ref: (b_tile, S, E) batch-major block; g_ref, b_ref: (1, E)."""
    b_tile, S, E = x_ref.shape
    D = E // num_heads
    scale = 1.0 / float(D) ** 0.5

    gamma = g_ref[...].astype(jnp.float32)            # (1, E)
    beta = b_ref[...].astype(jnp.float32)             # (1, E)

    for b in range(b_tile):                           # static unroll (capped)
        xb = x_ref[b].astype(jnp.float32)             # dense (S, E) slab
        xq = xb * scale                               # scale q once for all heads

        head_outs = []
        for h in range(num_heads):                    # static unroll over heads
            lo = h * D
            qh = xq[:, lo:lo + D]                     # (S, D)
            kh = xb[:, lo:lo + D]                     # (S, D)  (= v)
            # scores = q @ k^T, contracting last dims (no explicit transpose)
            s = lax.dot_general(
                qh, kh,
                dimension_numbers=(((1,), (1,)), ((), ())),
                preferred_element_type=jnp.float32)   # (S, S)
            # numerically-stabilized softmax over keys
            s = s - jnp.max(s, axis=-1, keepdims=True)
            p = jnp.exp(s)
            p = p * pl.reciprocal(jnp.sum(p, axis=-1, keepdims=True),
                                  approx=True)
            head_outs.append(
                jnp.dot(p, kh, preferred_element_type=jnp.float32))  # (S, D)

        sa = jnp.concatenate(head_outs, axis=-1)      # (S, E)

        # residual + LayerNorm over the embed dim
        y = xb + sa
        mu = jnp.mean(y, axis=-1, keepdims=True)
        yc = y - mu
        var = jnp.mean(yc * yc, axis=-1, keepdims=True)
        out = yc * lax.rsqrt(var + LN_EPS) * gamma + beta
        o_ref[b] = out.astype(o_ref.dtype)            # dense (S, E) store


# ---------------------------------------------------------------------------
# Tiling helper
# ---------------------------------------------------------------------------
def _pick_batch_tile(S, B, E, itemsize=4, *, max_unroll=8,
                     block_budget=2 * 1024 * 1024):
    """Largest divisor of B (<= max_unroll) whose (bt, S, E) block fits budget."""
    best = 1
    for bt in range(1, min(B, max_unroll) + 1):
        if B % bt == 0 and bt * S * E * itemsize <= block_budget:
            best = bt
    return best


# ---------------------------------------------------------------------------
# Wrapper
# ---------------------------------------------------------------------------
@functools.partial(jax.jit, static_argnames=("num_heads",))
def no_affine_encoder_layer(src, gamma, beta, *, num_heads):
    """src: (S, B, E); gamma/beta: (E,).  Returns LayerNorm(src + SDPA(src))."""
    S, B, E = src.shape
    assert E % num_heads == 0
    D = E // num_heads

    # Batch-major layout so every kernel tile is a dense (S, E) slab and the
    # block's last two dims equal the full array dims (always-legal tiling).
    x_bse = jnp.transpose(src, (1, 0, 2))             # (B, S, E)

    b_tile = _pick_batch_tile(S, B, E, itemsize=src.dtype.itemsize)
    assert B % b_tile == 0

    flops = 4 * B * num_heads * S * S * D             # two matmuls per (b, h)
    transcendentals = B * num_heads * S * S           # softmax exp
    bytes_accessed = (2 * S * B * E + 2 * E) * src.dtype.itemsize

    kernel = functools.partial(_fused_kernel, num_heads=num_heads)

    out_bse = pl.pallas_call(
        kernel,
        out_shape=jax.ShapeDtypeStruct((B, S, E), src.dtype),
        grid=(B // b_tile,),
        in_specs=[
            pl.BlockSpec((b_tile, S, E), lambda i: (i, 0, 0)),
            pl.BlockSpec((1, E), lambda i: (0, 0)),
            pl.BlockSpec((1, E), lambda i: (0, 0)),
        ],
        out_specs=pl.BlockSpec((b_tile, S, E), lambda i: (i, 0, 0)),
        compiler_params=pltpu.CompilerParams(
            dimension_semantics=("parallel",),
            vmem_limit_bytes=32 * 1024 * 1024,
        ),
        cost_estimate=pl.CostEstimate(
            flops=flops,
            transcendentals=transcendentals,
            bytes_accessed=bytes_accessed,
        ),
    )(x_bse, gamma.reshape(1, E), beta.reshape(1, E))

    return jnp.transpose(out_bse, (1, 0, 2))          # back to (S, B, E)


# ---------------------------------------------------------------------------
# Pure-JAX reference (for correctness check)
# ---------------------------------------------------------------------------
def _reference(src, gamma, beta, num_heads):
    S, B, E = src.shape
    D = E // num_heads
    x = src.reshape(S, B * num_heads, D).transpose(1, 0, 2)        # (BH, S, D)
    q = x / jnp.sqrt(jnp.float32(D))
    attn = jax.nn.softmax(jnp.einsum("bqd,bkd->bqk", q, x), axis=-1)
    o = jnp.einsum("bqk,bkd->bqd", attn, x)
    sa = o.transpose(1, 0, 2).reshape(S, B, E)
    y = src + sa
    mu = jnp.mean(y, axis=-1, keepdims=True)
    var = jnp.mean((y - mu) ** 2, axis=-1, keepdims=True)
    return (y - mu) / jnp.sqrt(var + LN_EPS) * gamma + beta


if __name__ == "__main__":
    key = jax.random.PRNGKey(0)
    S, B, E, H = 8, 2, 32, 4   # seq, batch, embed, heads (head_dim = 8)

    src = jax.random.normal(key, (S, B, E), dtype=jnp.float32)
    # nn.LayerNorm default init: weight = ones, bias = zeros (deterministic)
    gamma = jnp.ones((E,), dtype=jnp.float32)
    beta = jnp.zeros((E,), dtype=jnp.float32)

    out = no_affine_encoder_layer(src, gamma, beta, num_heads=H)
    out = jax.block_until_ready(out)

    ref = _reference(src, gamma, beta, H)
    assert out.shape == (S, B, E)
    # tolerance loosened slightly vs. exact softmax because the kernel uses the
    # EUP approximate reciprocal for the softmax denominator.
    assert jnp.allclose(out, ref, atol=2e-3, rtol=2e-3), "mismatch vs reference"

    print("KERNEL_OK")
</pallas_src>

<mosaic_0001>
module attributes {stable_mosaic.version = 11 : i64} {
  func.func @_fused_kernel(%arg0: i32, %arg1: memref<2x8x32xf32, #tpu.memory_space<vmem>>, %arg2: memref<1x32xf32, #tpu.memory_space<vmem>>, %arg3: memref<1x32xf32, #tpu.memory_space<vmem>>, %arg4: memref<2x8x32xf32, #tpu.memory_space<vmem>>) attributes {dimension_semantics = [#tpu.dimension_semantics<parallel>], iteration_bounds = array<i64: 1>, scalar_prefetch = 0 : i64, scratch_operands = 0 : i64, tpu.core_type = #tpu.core_type<tc>, window_params = [{transform_indices = @transform_0, window_bounds = array<i64: 2, 8, 32>}, {pipeline_mode = #tpu.pipeline_mode<synchronous>, transform_indices = @transform_1, window_bounds = array<i64: 1, 32>}, {pipeline_mode = #tpu.pipeline_mode<synchronous>, transform_indices = @transform_2, window_bounds = array<i64: 1, 32>}, {transform_indices = @transform_3, window_bounds = array<i64: 2, 8, 32>}]} {
    %c0 = arith.constant 0 : index
    %c0_0 = arith.constant 0 : index
    %0 = vector.load %arg2[%c0, %c0_0] : memref<1x32xf32, #tpu.memory_space<vmem>>, vector<1x32xf32>
    %c0_1 = arith.constant 0 : index
    %c0_2 = arith.constant 0 : index
    %1 = vector.load %arg3[%c0_1, %c0_2] : memref<1x32xf32, #tpu.memory_space<vmem>>, vector<1x32xf32>
    %c0_3 = arith.constant 0 : index
    %c0_4 = arith.constant 0 : index
    %c0_5 = arith.constant 0 : index
    %2 = vector.load %arg1[%c0_3, %c0_4, %c0_5] : memref<2x8x32xf32, #tpu.memory_space<vmem>>, vector<1x8x32xf32>
    %3 = vector.shape_cast %2 : vector<1x8x32xf32> to vector<8x32xf32>
    %cst = arith.constant 0.353553385 : f32
    %4 = vector.broadcast %cst : f32 to vector<8x32xf32>
    %5 = arith.mulf %3, %4 : vector<8x32xf32>
    %6 = vector.extract_strided_slice %5 {offsets = [0, 0], sizes = [8, 8], strides = [1, 1]} : vector<8x32xf32> to vector<8x8xf32>
    %7 = vector.extract_strided_slice %3 {offsets = [0, 0], sizes = [8, 8], strides = [1, 1]} : vector<8x32xf32> to vector<8x8xf32>
    %cst_6 = arith.constant dense<0.000000e+00> : vector<8x8xf32>
    %8 = tpu.matmul %6, %7, %cst_6 {dimension_numbers = #tpu.dot_dimension_numbers<[1], [1], [0], [0], [0, 0, 1, 0], [], []>} : vector<8x8xf32>, vector<8x8xf32>, vector<8x8xf32> -> vector<8x8xf32>
    %cst_7 = arith.constant dense<0xFF800000> : vector<8xf32>
    %9 = vector.multi_reduction <maximumf>, %8, %cst_7 [1] : vector<8x8xf32> to vector<8xf32>
    %10 = vector.shape_cast %9 : vector<8xf32> to vector<8x1xf32>
    %11 = vector.broadcast %10 : vector<8x1xf32> to vector<8x8xf32>
    %12 = arith.subf %8, %11 : vector<8x8xf32>
    %13 = math.exp %12 : vector<8x8xf32>
    %cst_8 = arith.constant dense<0.000000e+00> : vector<8xf32>
    %14 = vector.multi_reduction <add>, %13, %cst_8 [1] : vector<8x8xf32> to vector<8xf32>
    %15 = vector.shape_cast %14 : vector<8xf32> to vector<8x1xf32>
    %16 = tpu.reciprocal %15 {approx = true} : vector<8x1xf32> -> vector<8x1xf32>
    %17 = vector.broadcast %16 : vector<8x1xf32> to vector<8x8xf32>
    %18 = arith.mulf %13, %17 : vector<8x8xf32>
    %cst_9 = arith.constant dense<0.000000e+00> : vector<8x8xf32>
    %19 = tpu.matmul %18, %7, %cst_9 {dimension_numbers = #tpu.dot_dimension_numbers<[1], [0], [0], [1], [0, 0, 1, 1], [], []>} : vector<8x8xf32>, vector<8x8xf32>, vector<8x8xf32> -> vector<8x8xf32>
    %20 = vector.extract_strided_slice %5 {offsets = [0, 8], sizes = [8, 8], strides = [1, 1]} : vector<8x32xf32> to vector<8x8xf32>
    %21 = vector.extract_strided_slice %3 {offsets = [0, 8], sizes = [8, 8], strides = [1, 1]} : vector<8x32xf32> to vector<8x8xf32>
    %cst_10 = arith.constant dense<0.000000e+00> : vector<8x8xf32>
    %22 = tpu.matmul %20, %21, %cst_10 {dimension_numbers = #tpu.dot_dimension_numbers<[1], [1], [0], [0], [0, 0, 1, 0], [], []>} : vector<8x8xf32>, vector<8x8xf32>, vector<8x8xf32> -> vector<8x8xf32>
    %cst_11 = arith.constant dense<0xFF800000> : vector<8xf32>
    %23 = vector.multi_reduction <maximumf>, %22, %cst_11 [1] : vector<8x8xf32> to vector<8xf32>
    %24 = vector.shape_cast %23 : vector<8xf32> to vector<8x1xf32>
    %25 = vector.broadcast %24 : vector<8x1xf32> to vector<8x8xf32>
    %26 = arith.subf %22, %25 : vector<8x8xf32>
    %27 = math.exp %26 : vector<8x8xf32>
    %cst_12 = arith.constant dense<0.000000e+00> : vector<8xf32>
    %28 = vector.multi_reduction <add>, %27, %cst_12 [1] : vector<8x8xf32> to vector<8xf32>
    %29 = vector.shape_cast %28 : vector<8xf32> to vector<8x1xf32>
    %30 = tpu.reciprocal %29 {approx = true} : vector<8x1xf32> -> vector<8x1xf32>
    %31 = vector.broadcast %30 : vector<8x1xf32> to vector<8x8xf32>
    %32 = arith.mulf %27, %31 : vector<8x8xf32>
    %cst_13 = arith.constant dense<0.000000e+00> : vector<8x8xf32>
    %33 = tpu.matmul %32, %21, %cst_13 {dimension_numbers = #tpu.dot_dimension_numbers<[1], [0], [0], [1], [0, 0, 1, 1], [], []>} : vector<8x8xf32>, vector<8x8xf32>, vector<8x8xf32> -> vector<8x8xf32>
    %34 = vector.extract_strided_slice %5 {offsets = [0, 16], sizes = [8, 8], strides = [1, 1]} : vector<8x32xf32> to vector<8x8xf32>
    %35 = vector.extract_strided_slice %3 {offsets = [0, 16], sizes = [8, 8], strides = [1, 1]} : vector<8x32xf32> to vector<8x8xf32>
    %cst_14 = arith.constant dense<0.000000e+00> : vector<8x8xf32>
    %36 = tpu.matmul %34, %35, %cst_14 {dimension_numbers = #tpu.dot_dimension_numbers<[1], [1], [0], [0], [0, 0, 1, 0], [], []>} : vector<8x8xf32>, vector<8x8xf32>, vector<8x8xf32> -> vector<8x8xf32>
    %cst_15 = arith.constant dense<0xFF800000> : vector<8xf32>
    %37 = vector.multi_reduction <maximumf>, %36, %cst_15 [1] : vector<8x8xf32> to vector<8xf32>
    %38 = vector.shape_cast %37 : vector<8xf32> to vector<8x1xf32>
    %39 = vector.broadcast %38 : vector<8x1xf32> to vector<8x8xf32>
    %40 = arith.subf %36, %39 : vector<8x8xf32>
    %41 = math.exp %40 : vector<8x8xf32>
    %cst_16 = arith.constant dense<0.000000e+00> : vector<8xf32>
    %42 = vector.multi_reduction <add>, %41, %cst_16 [1] : vector<8x8xf32> to vector<8xf32>
    %43 = vector.shape_cast %42 : vector<8xf32> to vector<8x1xf32>
    %44 = tpu.reciprocal %43 {approx = true} : vector<8x1xf32> -> vector<8x1xf32>
    %45 = vector.broadcast %44 : vector<8x1xf32> to vector<8x8xf32>
    %46 = arith.mulf %41, %45 : vector<8x8xf32>
    %cst_17 = arith.constant dense<0.000000e+00> : vector<8x8xf32>
    %47 = tpu.matmul %46, %35, %cst_17 {dimension_numbers = #tpu.dot_dimension_numbers<[1], [0], [0], [1], [0, 0, 1, 1], [], []>} : vector<8x8xf32>, vector<8x8xf32>, vector<8x8xf32> -> vector<8x8xf32>
    %48 = vector.extract_strided_slice %5 {offsets = [0, 24], sizes = [8, 8], strides = [1, 1]} : vector<8x32xf32> to vector<8x8xf32>
    %49 = vector.extract_strided_slice %3 {offsets = [0, 24], sizes = [8, 8], strides = [1, 1]} : vector<8x32xf32> to vector<8x8xf32>
    %cst_18 = arith.constant dense<0.000000e+00> : vector<8x8xf32>
    %50 = tpu.matmul %48, %49, %cst_18 {dimension_numbers = #tpu.dot_dimension_numbers<[1], [1], [0], [0], [0, 0, 1, 0], [], []>} : vector<8x8xf32>, vector<8x8xf32>, vector<8x8xf32> -> vector<8x8xf32>
    %cst_19 = arith.constant dense<0xFF800000> : vector<8xf32>
    %51 = vector.multi_reduction <maximumf>, %50, %cst_19 [1] : vector<8x8xf32> to vector<8xf32>
    %52 = vector.shape_cast %51 : vector<8xf32> to vector<8x1xf32>
    %53 = vector.broadcast %52 : vector<8x1xf32> to vector<8x8xf32>
    %54 = arith.subf %50, %53 : vector<8x8xf32>
    %55 = math.exp %54 : vector<8x8xf32>
    %cst_20 = arith.constant dense<0.000000e+00> : vector<8xf32>
    %56 = vector.multi_reduction <add>, %55, %cst_20 [1] : vector<8x8xf32> to vector<8xf32>
    %57 = vector.shape_cast %56 : vector<8xf32> to vector<8x1xf32>
    %58 = tpu.reciprocal %57 {approx = true} : vector<8x1xf32> -> vector<8x1xf32>
    %59 = vector.broadcast %58 : vector<8x1xf32> to vector<8x8xf32>
    %60 = arith.mulf %55, %59 : vector<8x8xf32>
    %cst_21 = arith.constant dense<0.000000e+00> : vector<8x8xf32>
    %61 = tpu.matmul %60, %49, %cst_21 {dimension_numbers = #tpu.dot_dimension_numbers<[1], [0], [0], [1], [0, 0, 1, 1], [], []>} : vector<8x8xf32>, vector<8x8xf32>, vector<8x8xf32> -> vector<8x8xf32>
    %62 = tpu.concatenate %19, %33, %47, %61 in 1 : vector<8x8xf32>, vector<8x8xf32>, vector<8x8xf32>, vector<8x8xf32> -> vector<8x32xf32>
    %63 = arith.addf %3, %62 : vector<8x32xf32>
    %cst_22 = arith.constant dense<0.000000e+00> : vector<8xf32>
    %64 = vector.multi_reduction <add>, %63, %cst_22 [1] : vector<8x32xf32> to vector<8xf32>
    %65 = vector.shape_cast %64 : vector<8xf32> to vector<8x1xf32>
    %cst_23 = arith.constant 3.200000e+01 : f32
    %66 = vector.broadcast %cst_23 : f32 to vector<8x1xf32>
    %67 = arith.divf %65, %66 : vector<8x1xf32>
    %68 = vector.broadcast %67 : vector<8x1xf32> to vector<8x32xf32>
    %69 = arith.subf %63, %68 : vector<8x32xf32>
    %70 = arith.mulf %69, %69 : vector<8x32xf32>
    %cst_24 = arith.constant dense<0.000000e+00> : vector<8xf32>
    %71 = vector.multi_reduction <add>, %70, %cst_24 [1] : vector<8x32xf32> to vector<8xf32>
    %72 = vector.shape_cast %71 : vector<8xf32> to vector<8x1xf32>
    %cst_25 = arith.constant 3.200000e+01 : f32
    %73 = vector.broadcast %cst_25 : f32 to vector<8x1xf32>
    %74 = arith.divf %72, %73 : vector<8x1xf32>
    %cst_26 = arith.constant 9.99999974E-6 : f32
    %75 = vector.broadcast %cst_26 : f32 to vector<8x1xf32>
    %76 = arith.addf %74, %75 : vector<8x1xf32>
    %77 = math.rsqrt %76 : vector<8x1xf32>
    %78 = vector.broadcast %77 : vector<8x1xf32> to vector<8x32xf32>
    %79 = arith.mulf %69, %78 : vector<8x32xf32>
    %80 = vector.broadcast %0 : vector<1x32xf32> to vector<8x32xf32>
    %81 = arith.mulf %79, %80 : vector<8x32xf32>
    %82 = vector.broadcast %1 : vector<1x32xf32> to vector<8x32xf32>
    %83 = arith.addf %81, %82 : vector<8x32xf32>
    %c0_27 = arith.constant 0 : index
    %c0_28 = arith.constant 0 : index
    %c0_29 = arith.constant 0 : index
    %84 = vector.load %arg4[%c0_27, %c0_28, %c0_29] : memref<2x8x32xf32, #tpu.memory_space<vmem>>, vector<1x8x32xf32>
    %85 = vector.shape_cast %84 : vector<1x8x32xf32> to vector<8x32xf32>
    %86 = vector.shape_cast %83 : vector<8x32xf32> to vector<1x8x32xf32>
    tpu.vector_store %arg4[%c0_27, %c0_28, %c0_29], %86 {strides = array<i32>} : memref<2x8x32xf32, #tpu.memory_space<vmem>>, vector<1x8x32xf32>,
    %c1 = arith.constant 1 : index
    %c0_30 = arith.constant 0 : index
    %c0_31 = arith.constant 0 : index
    %87 = vector.load %arg1[%c1, %c0_30, %c0_31] : memref<2x8x32xf32, #tpu.memory_space<vmem>>, vector<1x8x32xf32>
    %88 = vector.shape_cast %87 : vector<1x8x32xf32> to vector<8x32xf32>
    %cst_32 = arith.constant 0.353553385 : f32
    %89 = vector.broadcast %cst_32 : f32 to vector<8x32xf32>
    %90 = arith.mulf %88, %89 : vector<8x32xf32>
    %91 = vector.extract_strided_slice %90 {offsets = [0, 0], sizes = [8, 8], strides = [1, 1]} : vector<8x32xf32> to vector<8x8xf32>
    %92 = vector.extract_strided_slice %88 {offsets = [0, 0], sizes = [8, 8], strides = [1, 1]} : vector<8x32xf32> to vector<8x8xf32>
    %cst_33 = arith.constant dense<0.000000e+00> : vector<8x8xf32>
    %93 = tpu.matmul %91, %92, %cst_33 {dimension_numbers = #tpu.dot_dimension_numbers<[1], [1], [0], [0], [0, 0, 1, 0], [], []>} : vector<8x8xf32>, vector<8x8xf32>, vector<8x8xf32> -> vector<8x8xf32>
    %cst_34 = arith.constant dense<0xFF800000> : vector<8xf32>
    %94 = vector.multi_reduction <maximumf>, %93, %cst_34 [1] : vector<8x8xf32> to vector<8xf32>
    %95 = vector.shape_cast %94 : vector<8xf32> to vector<8x1xf32>
    %96 = vector.broadcast %95 : vector<8x1xf32> to vector<8x8xf32>
    %97 = arith.subf %93, %96 : vector<8x8xf32>
    %98 = math.exp %97 : vector<8x8xf32>
    %cst_35 = arith.constant dense<0.000000e+00> : vector<8xf32>
    %99 = vector.multi_reduction <add>, %98, %cst_35 [1] : vector<8x8xf32> to vector<8xf32>
    %100 = vector.shape_cast %99 : vector<8xf32> to vector<8x1xf32>
    %101 = tpu.reciprocal %100 {approx = true} : vector<8x1xf32> -> vector<8x1xf32>
    %102 = vector.broadcast %101 : vector<8x1xf32> to vector<8x8xf32>
    %103 = arith.mulf %98, %102 : vector<8x8xf32>
    %cst_36 = arith.constant dense<0.000000e+00> : vector<8x8xf32>
    %104 = tpu.matmul %103, %92, %cst_36 {dimension_numbers = #tpu.dot_dimension_numbers<[1], [0], [0], [1], [0, 0, 1, 1], [], []>} : vector<8x8xf32>, vector<8x8xf32>, vector<8x8xf32> -> vector<8x8xf32>
    %105 = vector.extract_strided_slice %90 {offsets = [0, 8], sizes = [8, 8], strides = [1, 1]} : vector<8x32xf32> to vector<8x8xf32>
    %106 = vector.extract_strided_slice %88 {offsets = [0, 8], sizes = [8, 8], strides = [1, 1]} : vector<8x32xf32> to vector<8x8xf32>
    %cst_37 = arith.constant dense<0.000000e+00> : vector<8x8xf32>
    %107 = tpu.matmul %105, %106, %cst_37 {dimension_numbers = #tpu.dot_dimension_numbers<[1], [1], [0], [0], [0, 0, 1, 0], [], []>} : vector<8x8xf32>, vector<8x8xf32>, vector<8x8xf32> -> vector<8x8xf32>
    %cst_38 = arith.constant dense<0xFF800000> : vector<8xf32>
    %108 = vector.multi_reduction <maximumf>, %107, %cst_38 [1] : vector<8x8xf32> to vector<8xf32>
    %109 = vector.shape_cast %108 : vector<8xf32> to vector<8x1xf32>
    %110 = vector.broadcast %109 : vector<8x1xf32> to vector<8x8xf32>
    %111 = arith.subf %107, %110 : vector<8x8xf32>
    %112 = math.exp %111 : vector<8x8xf32>
    %cst_39 = arith.constant dense<0.000000e+00> : vector<8xf32>
    %113 = vector.multi_reduction <add>, %112, %cst_39 [1] : vector<8x8xf32> to vector<8xf32>
    %114 = vector.shape_cast %113 : vector<8xf32> to vector<8x1xf32>
    %115 = tpu.reciprocal %114 {approx = true} : vector<8x1xf32> -> vector<8x1xf32>
    %116 = vector.broadcast %115 : vector<8x1xf32> to vector<8x8xf32>
    %117 = arith.mulf %112, %116 : vector<8x8xf32>
    %cst_40 = arith.constant dense<0.000000e+00> : vector<8x8xf32>
    %118 = tpu.matmul %117, %106, %cst_40 {dimension_numbers = #tpu.dot_dimension_numbers<[1], [0], [0], [1], [0, 0, 1, 1], [], []>} : vector<8x8xf32>, vector<8x8xf32>, vector<8x8xf32> -> vector<8x8xf32>
    %119 = vector.extract_strided_slice %90 {offsets = [0, 16], sizes = [8, 8], strides = [1, 1]} : vector<8x32xf32> to vector<8x8xf32>
    %120 = vector.extract_strided_slice %88 {offsets = [0, 16], sizes = [8, 8], strides = [1, 1]} : vector<8x32xf32> to vector<8x8xf32>
    %cst_41 = arith.constant dense<0.000000e+00> : vector<8x8xf32>
    %121 = tpu.matmul %119, %120, %cst_41 {dimension_numbers = #tpu.dot_dimension_numbers<[1], [1], [0], [0], [0, 0, 1, 0], [], []>} : vector<8x8xf32>, vector<8x8xf32>, vector<8x8xf32> -> vector<8x8xf32>
    %cst_42 = arith.constant dense<0xFF800000> : vector<8xf32>
    %122 = vector.multi_reduction <maximumf>, %121, %cst_42 [1] : vector<8x8xf32> to vector<8xf32>
    %123 = vector.shape_cast %122 : vector<8xf32> to vector<8x1xf32>
    %124 = vector.broadcast %123 : vector<8x1xf32> to vector<8x8xf32>
    %125 = arith.subf %121, %124 : vector<8x8xf32>
    %126 = math.exp %125 : vector<8x8xf32>
    %cst_43 = arith.constant dense<0.000000e+00> : vector<8xf32>
    %127 = vector.multi_reduction <add>, %126, %cst_43 [1] : vector<8x8xf32> to vector<8xf32>
    %128 = vector.shape_cast %127 : vector<8xf32> to vector<8x1xf32>
    %129 = tpu.reciprocal %128 {approx = true} : vector<8x1xf32> -> vector<8x1xf32>
    %130 = vector.broadcast %129 : vector<8x1xf32> to vector<8x8xf32>
    %131 = arith.mulf %126, %130 : vector<8x8xf32>
    %cst_44 = arith.constant dense<0.000000e+00> : vector<8x8xf32>
    %132 = tpu.matmul %131, %120, %cst_44 {dimension_numbers = #tpu.dot_dimension_numbers<[1], [0], [0], [1], [0, 0, 1, 1], [], []>} : vector<8x8xf32>, vector<8x8xf32>, vector<8x8xf32> -> vector<8x8xf32>
    %133 = vector.extract_strided_slice %90 {offsets = [0, 24], sizes = [8, 8], strides = [1, 1]} : vector<8x32xf32> to vector<8x8xf32>
    %134 = vector.extract_strided_slice %88 {offsets = [0, 24], sizes = [8, 8], strides = [1, 1]} : vector<8x32xf32> to vector<8x8xf32>
    %cst_45 = arith.constant dense<0.000000e+00> : vector<8x8xf32>
    %135 = tpu.matmul %133, %134, %cst_45 {dimension_numbers = #tpu.dot_dimension_numbers<[1], [1], [0], [0], [0, 0, 1, 0], [], []>} : vector<8x8xf32>, vector<8x8xf32>, vector<8x8xf32> -> vector<8x8xf32>
    %cst_46 = arith.constant dense<0xFF800000> : vector<8xf32>
    %136 = vector.multi_reduction <maximumf>, %135, %cst_46 [1] : vector<8x8xf32> to vector<8xf32>
    %137 = vector.shape_cast %136 : vector<8xf32> to vector<8x1xf32>
    %138 = vector.broadcast %137 : vector<8x1xf32> to vector<8x8xf32>
    %139 = arith.subf %135, %138 : vector<8x8xf32>
    %140 = math.exp %139 : vector<8x8xf32>
    %cst_47 = arith.constant dense<0.000000e+00> : vector<8xf32>
    %141 = vector.multi_reduction <add>, %140, %cst_47 [1] : vector<8x8xf32> to vector<8xf32>
    %142 = vector.shape_cast %141 : vector<8xf32> to vector<8x1xf32>
    %143 = tpu.reciprocal %142 {approx = true} : vector<8x1xf32> -> vector<8x1xf32>
    %144 = vector.broadcast %143 : vector<8x1xf32> to vector<8x8xf32>
    %145 = arith.mulf %140, %144 : vector<8x8xf32>
    %cst_48 = arith.constant dense<0.000000e+00> : vector<8x8xf32>
    %146 = tpu.matmul %145, %134, %cst_48 {dimension_numbers = #tpu.dot_dimension_numbers<[1], [0], [0], [1], [0, 0, 1, 1], [], []>} : vector<8x8xf32>, vector<8x8xf32>, vector<8x8xf32> -> vector<8x8xf32>
    %147 = tpu.concatenate %104, %118, %132, %146 in 1 : vector<8x8xf32>, vector<8x8xf32>, vector<8x8xf32>, vector<8x8xf32> -> vector<8x32xf32>
    %148 = arith.addf %88, %147 : vector<8x32xf32>
    %cst_49 = arith.constant dense<0.000000e+00> : vector<8xf32>
    %149 = vector.multi_reduction <add>, %148, %cst_49 [1] : vector<8x32xf32> to vector<8xf32>
    %150 = vector.shape_cast %149 : vector<8xf32> to vector<8x1xf32>
    %cst_50 = arith.constant 3.200000e+01 : f32
    %151 = vector.broadcast %cst_50 : f32 to vector<8x1xf32>
    %152 = arith.divf %150, %151 : vector<8x1xf32>
    %153 = vector.broadcast %152 : vector<8x1xf32> to vector<8x32xf32>
    %154 = arith.subf %148, %153 : vector<8x32xf32>
    %155 = arith.mulf %154, %154 : vector<8x32xf32>
    %cst_51 = arith.constant dense<0.000000e+00> : vector<8xf32>
    %156 = vector.multi_reduction <add>, %155, %cst_51 [1] : vector<8x32xf32> to vector<8xf32>
    %157 = vector.shape_cast %156 : vector<8xf32> to vector<8x1xf32>
    %cst_52 = arith.constant 3.200000e+01 : f32
    %158 = vector.broadcast %cst_52 : f32 to vector<8x1xf32>
    %159 = arith.divf %157, %158 : vector<8x1xf32>
    %cst_53 = arith.constant 9.99999974E-6 : f32
    %160 = vector.broadcast %cst_53 : f32 to vector<8x1xf32>
    %161 = arith.addf %159, %160 : vector<8x1xf32>
    %162 = math.rsqrt %161 : vector<8x1xf32>
    %163 = vector.broadcast %162 : vector<8x1xf32> to vector<8x32xf32>
    %164 = arith.mulf %154, %163 : vector<8x32xf32>
    %165 = vector.broadcast %0 : vector<1x32xf32> to vector<8x32xf32>
    %166 = arith.mulf %164, %165 : vector<8x32xf32>
    %167 = vector.broadcast %1 : vector<1x32xf32> to vector<8x32xf32>
    %168 = arith.addf %166, %167 : vector<8x32xf32>
    %c1_54 = arith.constant 1 : index
    %c0_55 = arith.constant 0 : index
    %c0_56 = arith.constant 0 : index
    %169 = vector.load %arg4[%c1_54, %c0_55, %c0_56] : memref<2x8x32xf32, #tpu.memory_space<vmem>>, vector<1x8x32xf32>
    %170 = vector.shape_cast %169 : vector<1x8x32xf32> to vector<8x32xf32>
    %171 = vector.shape_cast %168 : vector<8x32xf32> to vector<1x8x32xf32>
    tpu.vector_store %arg4[%c1_54, %c0_55, %c0_56], %171 {strides = array<i32>} : memref<2x8x32xf32, #tpu.memory_space<vmem>>, vector<1x8x32xf32>,
    return
  }
  func.func @transform_0(%arg0: i32) -> (i32, i32, i32) {
    %c0_i32 = arith.constant 0 : i32
    %c0_i32_0 = arith.constant 0 : i32
    %c0_i32_1 = arith.constant 0 : i32
    return %arg0, %c0_i32, %c0_i32_0 : i32, i32, i32
  }
  func.func @transform_1(%arg0: i32) -> (i32, i32) {
    %c0_i32 = arith.constant 0 : i32
    %c0_i32_0 = arith.constant 0 : i32
    %c0_i32_1 = arith.constant 0 : i32
    return %c0_i32, %c0_i32_0 : i32, i32
  }
  func.func @transform_2(%arg0: i32) -> (i32, i32) {
    %c0_i32 = arith.constant 0 : i32
    %c0_i32_0 = arith.constant 0 : i32
    %c0_i32_1 = arith.constant 0 : i32
    return %c0_i32, %c0_i32_0 : i32, i32
  }
  func.func @transform_3(%arg0: i32) -> (i32, i32, i32) {
    %c0_i32 = arith.constant 0 : i32
    %c0_i32_0 = arith.constant 0 : i32
    %c0_i32_1 = arith.constant 0 : i32
    return %arg0, %c0_i32, %c0_i32_0 : i32, i32, i32
  }
}

</mosaic_0001>

<llo_original>
// kernel: no_affine_encoder_layer.1
$region0: #{no_affine_encoder_layer.1}
  #allocation0 [shape = 'u32[]', space=smem, size = 0x4, offset = 0x4, fixed_abs, tag = 'smem constant byte address 0x4 - core index']
  #allocation1 [shape = 'u32[144,128]{1,0:T(1,128)}', space=vmem, size = 0x12000, scoped, tag = 'internal scratch']
  %s0 = inlined_call_operand.vmem [shape: f32[2,8,32], index: 0, kind: input, shape index: {}]
  %s1 = inlined_call_operand.vmem [shape: f32[1,32], index: 1, kind: input, shape index: {}]
  %s2 = inlined_call_operand.vmem [shape: f32[1,32], index: 2, kind: input, shape index: {}]
  %s3 = inlined_call_operand.vmem [shape: f32[2,8,32], index: 3, kind: output, shape index: {}]
  %s4 = sld [smem:[#allocation0]]
  $region22: #{no_affine_encoder_layer.1} parent=0
    _
  %s6 = ssub.s32 1, %s4
  %s7 = scalar_select 0, %s6, %s4
  // Predicated region
  $region2: #{no_affine_encoder_layer.1} parent=0 // pred_check
    _
  $region3: #{no_affine_encoder_layer.1} parent=0 // pred_check_branch
    %9 = sbr.rel (0) target = $region5
  $region4: #{no_affine_encoder_layer.1} parent=0 // pred_region
    _
  $region5: #{no_affine_encoder_layer.1} parent=0 // pred_fallthru
    _
  // Predicated region
  $region6: #{no_affine_encoder_layer.1} parent=0 // pred_check
    _
  $region7: #{no_affine_encoder_layer.1} parent=0 // pred_check_branch
    %11 = sbr.rel (0) target = $region9
  $region8: #{no_affine_encoder_layer.1} parent=0 // pred_region
    _
  $region9: #{no_affine_encoder_layer.1} parent=0 // pred_fallthru
    _
  // Predicated region
  $region10: #{no_affine_encoder_layer.1} parent=0 // pred_check
    _
  $region11: #{no_affine_encoder_layer.1} parent=0 // pred_check_branch
    %13 = sbr.rel (0) target = $region13
  $region12: #{no_affine_encoder_layer.1} parent=0 // pred_region
    _
  $region13: #{no_affine_encoder_layer.1} parent=0 // pred_fallthru
    _
  %v14 = vld [vmem:[%s1] sm:$0x1]
  %v15 = vld [vmem:[%s2] sm:$0x1]
  %v16 = vld [vmem:[%s0] sm:$0xff]
  %v17 = vmul.f32 %v16, 0.35355338
  %vm18 = vcmask 64512
  %v20 = vsel %vm18, %v17, 0
  %v23 = vsel %vm18, %v16, 0
  %25 = vmatprep.subr.mxu0 0.0
  %26 = vmatpush1.xpose.msra.mxu0 %v23
  %27 = vmatprep.subr.mxu0 0.0
  %28 = vmatpush1.xpose.msra.mxu0 0.0
  %29 = vmatprep.subr.mxu0 0.0
  %30 = vmatpush1.xpose.msra.mxu0 0.0
  %31 = vmatprep.subr.mxu0 0.0
  %32 = vmatpush1.xpose.msra.mxu0 0.0
  %33 = vmatprep.subr.mxu0 0.0
  %34 = vmatpush1.xpose.msra.mxu0 0.0
  %35 = vmatprep.subr.mxu0 0.0
  %36 = vmatpush1.xpose.msra.mxu0 0.0
  %37 = vmatprep.subr.mxu0 0.0
  %38 = vmatpush1.xpose.msra.mxu0 0.0
  %39 = vmatprep.subr.mxu0 0.0
  %40 = vmatpush1.xpose.msra.mxu0 0.0
  %41 = vmatprep.subr.mxu0 0.0
  %42 = vmatpush1.xpose.msra.mxu0 0.0
  %43 = vmatprep.subr.mxu0 0.0
  %44 = vmatpush1.xpose.msra.mxu0 0.0
  %45 = vmatprep.subr.mxu0 0.0
  %46 = vmatpush1.xpose.msra.mxu0 0.0
  %47 = vmatprep.subr.mxu0 0.0
  %48 = vmatpush1.xpose.msra.mxu0 0.0
  %49 = vmatprep.subr.mxu0 0.0
  %50 = vmatpush1.xpose.msra.mxu0 0.0
  %51 = vmatprep.subr.mxu0 0.0
  %52 = vmatpush1.xpose.msra.mxu0 0.0
  %53 = vmatprep.subr.mxu0 0.0
  %54 = vmatpush1.xpose.msra.mxu0 0.0
  %55 = vmatprep.subr.mxu0 0.0
  %56 = vmatpush1.xpose.msra.mxu0 0.0
  %57 = vmatprep.subr.mxu0 0.0
  %58 = vmatpush1.xpose.msra.mxu0 0.0
  %59 = vmatprep.subr.mxu0 0.0
  %60 = vmatpush1.xpose.msra.mxu0 0.0
  %61 = vmatprep.subr.mxu0 0.0
  %62 = vmatpush1.xpose.msra.mxu0 0.0
  %63 = vmatprep.subr.mxu0 0.0
  %64 = vmatpush1.xpose.msra.mxu0 0.0
  %65 = vmatprep.subr.mxu0 0.0
  %66 = vmatpush1.xpose.msra.mxu0 0.0
  %67 = vmatprep.subr.mxu0 0.0
  %68 = vmatpush1.xpose.msra.mxu0 0.0
  %69 = vmatprep.subr.mxu0 0.0
  %70 = vmatpush1.xpose.msra.mxu0 0.0
  %71 = vmatprep.subr.mxu0 0.0
  %72 = vmatpush1.xpose.msra.mxu0 0.0
  %73 = vmatprep.subr.mxu0 0.0
  %74 = vmatpush1.xpose.msra.mxu0 0.0
  %75 = vmatprep.subr.mxu0 0.0
  %76 = vmatpush1.xpose.msra.mxu0 0.0
  %77 = vmatprep.subr.mxu0 0.0
  %78 = vmatpush1.xpose.msra.mxu0 0.0
  %79 = vmatprep.subr.mxu0 0.0
  %80 = vmatpush1.xpose.msra.mxu0 0.0
  %81 = vmatprep.subr.mxu0 0.0
  %82 = vmatpush1.xpose.msra.mxu0 0.0
  %83 = vmatprep.subr.mxu0 0.0
  %84 = vmatpush1.xpose.msra.mxu0 0.0
  %85 = vmatprep.subr.mxu0 0.0
  %86 = vmatpush1.xpose.msra.mxu0 0.0
  %87 = vmatprep.subr.mxu0 0.0
  %88 = vmatpush1.xpose.msra.mxu0 0.0
  %89 = vmatprep.mubr.f32.mxu0 0.0
  %90 = vmatmul.mubr.f32.gmra.mrb[0].mxu0 %v20
  %v91 = vpop.f32.mrb[0].mxu0
  %v92 = vadd.f32 0.0, %v91
  %v93 = vpop.f32.mrb[0].mxu0
  %94 = vdwg.mxu0
  %v95 = vsel %vm18, %v92, -inf
  %96 = vmax.xlane.f32.xlu0 %v95
  %v97 = vpop.xlane.xlu0 %96
  %v98 = vsub.f32 %v92, %v97
  %v99 = vmul.f32 %v98, 1.442695
  %v100 = vpow.pop %v99
  %v101 = vsel %vm18, %v100, 0.0
  %102 = vadd.xlane.f32.xlu0 %v101
  %v103 = vpop.xlane.xlu0 %102
  %v104 = vrcp.pop %v103
  %v105 = vmul.f32 %v100, %v104
  %v107 = vsel %vm18, %v105, 0
  %109 = vmatprep.subr.mxu0 0.0
  %110 = vmatpush1.msra.mxu0 %v16
  %111 = vmatprep.subr.mxu0 0.0
  %112 = vmatpush1.msra.mxu0 0.0
  %113 = vmatprep.subr.mxu0 0.0
  %114 = vmatpush1.msra.mxu0 0.0
  %115 = vmatprep.subr.mxu0 0.0
  %116 = vmatpush1.msra.mxu0 0.0
  %117 = vmatprep.subr.mxu0 0.0
  %118 = vmatpush1.msra.mxu0 0.0
  %119 = vmatprep.subr.mxu0 0.0
  %120 = vmatpush1.msra.mxu0 0.0
  %121 = vmatprep.subr.mxu0 0.0
  %122 = vmatpush1.msra.mxu0 0.0
  %123 = vmatprep.subr.mxu0 0.0
  %124 = vmatpush1.msra.mxu0 0.0
  %125 = vmatprep.subr.mxu0 0.0
  %126 = vmatpush1.msra.mxu0 0.0
  %127 = vmatprep.subr.mxu0 0.0
  %128 = vmatpush1.msra.mxu0 0.0
  %129 = vmatprep.subr.mxu0 0.0
  %130 = vmatpush1.msra.mxu0 0.0
  %131 = vmatprep.subr.mxu0 0.0
  %132 = vmatpush1.msra.mxu0 0.0
  %133 = vmatprep.subr.mxu0 0.0
  %134 = vmatpush1.msra.mxu0 0.0
  %135 = vmatprep.subr.mxu0 0.0
  %136 = vmatpush1.msra.mxu0 0.0
  %137 = vmatprep.subr.mxu0 0.0
  %138 = vmatpush1.msra.mxu0 0.0
  %139 = vmatprep.subr.mxu0 0.0
  %140 = vmatpush1.msra.mxu0 0.0
  %141 = vmatprep.subr.mxu0 0.0
  %142 = vmatpush1.msra.mxu0 0.0
  %143 = vmatprep.subr.mxu0 0.0
  %144 = vmatpush1.msra.mxu0 0.0
  %145 = vmatprep.subr.mxu0 0.0
  %146 = vmatpush1.msra.mxu0 0.0
  %147 = vmatprep.subr.mxu0 0.0
  %148 = vmatpush1.msra.mxu0 0.0
  %149 = vmatprep.subr.mxu0 0.0
  %150 = vmatpush1.msra.mxu0 0.0
  %151 = vmatprep.subr.mxu0 0.0
  %152 = vmatpush1.msra.mxu0 0.0
  %153 = vmatprep.subr.mxu0 0.0
  %154 = vmatpush1.msra.mxu0 0.0
  %155 = vmatprep.subr.mxu0 0.0
  %156 = vmatpush1.msra.mxu0 0.0
  %157 = vmatprep.subr.mxu0 0.0
  %158 = vmatpush1.msra.mxu0 0.0
  %159 = vmatprep.subr.mxu0 0.0
  %160 = vmatpush1.msra.mxu0 0.0
  %161 = vmatprep.subr.mxu0 0.0
  %162 = vmatpush1.msra.mxu0 0.0
  %163 = vmatprep.subr.mxu0 0.0
  %164 = vmatpush1.msra.mxu0 0.0
  %165 = vmatprep.subr.mxu0 0.0
  %166 = vmatpush1.msra.mxu0 0.0
  %167 = vmatprep.subr.mxu0 0.0
  %168 = vmatpush1.msra.mxu0 0.0
  %169 = vmatprep.subr.mxu0 0.0
  %170 = vmatpush1.msra.mxu0 0.0
  %171 = vmatprep.subr.mxu0 0.0
  %172 = vmatpush1.msra.mxu0 0.0
  %173 = vmatprep.mubr.f32.mxu0 0.0
  %174 = vmatmul.mubr.f32.gmra.mrb[0].mxu0 %v107
  %v175 = vpop.f32.mrb[0].mxu0
  %v176 = vadd.f32 0.0, %v175
  %v177 = vpop.f32.mrb[0].mxu0
  %178 = vdwg.mxu0
  %179 = vrot.lane.b32.xlu0 %v17, 120
  %v180 = vpop.permute.xlu0 %179
  %181 = vrot.lane.b32.xlu0 %v16, 120
  %v182 = vpop.permute.xlu0 %181
  %v183 = vsel %vm18, %v180, 0
  %v185 = vsel %vm18, %v182, 0
  %187 = vmatprep.subr.mxu0 0.0
  %188 = vmatpush1.xpose.msra.mxu0 %v185
  %189 = vmatprep.subr.mxu0 0.0
  %190 = vmatpush1.xpose.msra.mxu0 0.0
  %191 = vmatprep.subr.mxu0 0.0
  %192 = vmatpush1.xpose.msra.mxu0 0.0
  %193 = vmatprep.subr.mxu0 0.0
  %194 = vmatpush1.xpose.msra.mxu0 0.0
  %195 = vmatprep.subr.mxu0 0.0
  %196 = vmatpush1.xpose.msra.mxu0 0.0
  %197 = vmatprep.subr.mxu0 0.0
  %198 = vmatpush1.xpose.msra.mxu0 0.0
  %199 = vmatprep.subr.mxu0 0.0
  %200 = vmatpush1.xpose.msra.mxu0 0.0
  %201 = vmatprep.subr.mxu0 0.0
  %202 = vmatpush1.xpose.msra.mxu0 0.0
  %203 = vmatprep.subr.mxu0 0.0
  %204 = vmatpush1.xpose.msra.mxu0 0.0
  %205 = vmatprep.subr.mxu0 0.0
  %206 = vmatpush1.xpose.msra.mxu0 0.0
  %207 = vmatprep.subr.mxu0 0.0
  %208 = vmatpush1.xpose.msra.mxu0 0.0
  %209 = vmatprep.subr.mxu0 0.0
  %210 = vmatpush1.xpose.msra.mxu0 0.0
  %211 = vmatprep.subr.mxu0 0.0
  %212 = vmatpush1.xpose.msra.mxu0 0.0
  %213 = vmatprep.subr.mxu0 0.0
  %214 = vmatpush1.xpose.msra.mxu0 0.0
  %215 = vmatprep.subr.mxu0 0.0
  %216 = vmatpush1.xpose.msra.mxu0 0.0
  %217 = vmatprep.subr.mxu0 0.0
  %218 = vmatpush1.xpose.msra.mxu0 0.0
  %219 = vmatprep.subr.mxu0 0.0
  %220 = vmatpush1.xpose.msra.mxu0 0.0
  %221 = vmatprep.subr.mxu0 0.0
  %222 = vmatpush1.xpose.msra.mxu0 0.0
  %223 = vmatprep.subr.mxu0 0.0
  %224 = vmatpush1.xpose.msra.mxu0 0.0
  %225 = vmatprep.subr.mxu0 0.0
  %226 = vmatpush1.xpose.msra.mxu0 0.0
  %227 = vmatprep.subr.mxu0 0.0
  %228 = vmatpush1.xpose.msra.mxu0 0.0
  %229 = vmatprep.subr.mxu0 0.0
  %230 = vmatpush1.xpose.msra.mxu0 0.0
  %231 = vmatprep.subr.mxu0 0.0
  %232 = vmatpush1.xpose.msra.mxu0 0.0
  %233 = vmatprep.subr.mxu0 0.0
  %234 = vmatpush1.xpose.msra.mxu0 0.0
  %235 = vmatprep.subr.mxu0 0.0
  %236 = vmatpush1.xpose.msra.mxu0 0.0
  %237 = vmatprep.subr.mxu0 0.0
  %238 = vmatpush1.xpose.msra.mxu0 0.0
  %239 = vmatprep.subr.mxu0 0.0
  %240 = vmatpush1.xpose.msra.mxu0 0.0
  %241 = vmatprep.subr.mxu0 0.0
  %242 = vmatpush1.xpose.msra.mxu0 0.0
  %243 = vmatprep.subr.mxu0 0.0
  %244 = vmatpush1.xpose.msra.mxu0 0.0
  %245 = vmatprep.subr.mxu0 0.0
  %246 = vmatpush1.xpose.msra.mxu0 0.0
  %247 = vmatprep.subr.mxu0 0.0
  %248 = vmatpush1.xpose.msra.mxu0 0.0
  %249 = vmatprep.subr.mxu0 0.0
  %250 = vmatpush1.xpose.msra.mxu0 0.0
  %251 = vmatprep.mubr.f32.mxu0 0.0
  %252 = vmatmul.mubr.f32.gmra.mrb[0].mxu0 %v183
  %v253 = vpop.f32.mrb[0].mxu0
  %v254 = vadd.f32 0.0, %v253
  %v255 = vpop.f32.mrb[0].mxu0
  %256 = vdwg.mxu0
  %v257 = vsel %vm18, %v254, -inf
  %258 = vmax.xlane.f32.xlu0 %v257
  %v259 = vpop.xlane.xlu0 %258
  %v260 = vsub.f32 %v254, %v259
  %v261 = vmul.f32 %v260, 1.442695
  %v262 = vpow.pop %v261
  %v263 = vsel %vm18, %v262, 0.0
  %264 = vadd.xlane.f32.xlu0 %v263
  %v265 = vpop.xlane.xlu0 %264
  %v266 = vrcp.pop %v265
  %v267 = vmul.f32 %v262, %v266
  %v270 = vsel %vm18, %v267, 0
  %272 = vmatprep.subr.mxu0 0.0
  %273 = vmatpush1.msra.mxu0 %v182
  %274 = vmatprep.subr.mxu0 0.0
  %275 = vmatpush1.msra.mxu0 0.0
  %276 = vmatprep.subr.mxu0 0.0
  %277 = vmatpush1.msra.mxu0 0.0
  %278 = vmatprep.subr.mxu0 0.0
  %279 = vmatpush1.msra.mxu0 0.0
  %280 = vmatprep.subr.mxu0 0.0
  %281 = vmatpush1.msra.mxu0 0.0
  %282 = vmatprep.subr.mxu0 0.0
  %283 = vmatpush1.msra.mxu0 0.0
  %284 = vmatprep.subr.mxu0 0.0
  %285 = vmatpush1.msra.mxu0 0.0
  %286 = vmatprep.subr.mxu0 0.0
  %287 = vmatpush1.msra.mxu0 0.0
  %288 = vmatprep.subr.mxu0 0.0
  %289 = vmatpush1.msra.mxu0 0.0
  %290 = vmatprep.subr.mxu0 0.0
  %291 = vmatpush1.msra.mxu0 0.0
  %292 = vmatprep.subr.mxu0 0.0
  %293 = vmatpush1.msra.mxu0 0.0
  %294 = vmatprep.subr.mxu0 0.0
  %295 = vmatpush1.msra.mxu0 0.0
  %296 = vmatprep.subr.mxu0 0.0
  %297 = vmatpush1.msra.mxu0 0.0
  %298 = vmatprep.subr.mxu0 0.0
  %299 = vmatpush1.msra.mxu0 0.0
  %300 = vmatprep.subr.mxu0 0.0
  %301 = vmatpush1.msra.mxu0 0.0
  %302 = vmatprep.subr.mxu0 0.0
  %303 = vmatpush1.msra.mxu0 0.0
  %304 = vmatprep.subr.mxu0 0.0
  %305 = vmatpush1.msra.mxu0 0.0
  %306 = vmatprep.subr.mxu0 0.0
  %307 = vmatpush1.msra.mxu0 0.0
  %308 = vmatprep.subr.mxu0 0.0
  %309 = vmatpush1.msra.mxu0 0.0
  %310 = vmatprep.subr.mxu0 0.0
  %311 = vmatpush1.msra.mxu0 0.0
  %312 = vmatprep.subr.mxu0 0.0
  %313 = vmatpush1.msra.mxu0 0.0
  %314 = vmatprep.subr.mxu0 0.0
  %315 = vmatpush1.msra.mxu0 0.0
  %316 = vmatprep.subr.mxu0 0.0
  %317 = vmatpush1.msra.mxu0 0.0
  %318 = vmatprep.subr.mxu0 0.0
  %319 = vmatpush1.msra.mxu0 0.0
  %320 = vmatprep.subr.mxu0 0.0
  %321 = vmatpush1.msra.mxu0 0.0
  %322 = vmatprep.subr.mxu0 0.0
  %323 = vmatpush1.msra.mxu0 0.0
  %324 = vmatprep.subr.mxu0 0.0
  %325 = vmatpush1.msra.mxu0 0.0
  %326 = vmatprep.subr.mxu0 0.0
  %327 = vmatpush1.msra.mxu0 0.0
  %328 = vmatprep.subr.mxu0 0.0
  %329 = vmatpush1.msra.mxu0 0.0
  %330 = vmatprep.subr.mxu0 0.0
  %331 = vmatpush1.msra.mxu0 0.0
  %332 = vmatprep.subr.mxu0 0.0
  %333 = vmatpush1.msra.mxu0 0.0
  %334 = vmatprep.subr.mxu0 0.0
  %335 = vmatpush1.msra.mxu0 0.0
  %336 = vmatprep.mubr.f32.mxu0 0.0
  %337 = vmatmul.mubr.f32.gmra.mrb[0].mxu0 %v270
  %v338 = vpop.f32.mrb[0].mxu0
  %v339 = vadd.f32 0.0, %v338
  %v340 = vpop.f32.mrb[0].mxu0
  %341 = vdwg.mxu0
  %342 = vrot.lane.b32.xlu0 %v17, 112
  %v343 = vpop.permute.xlu0 %342
  %344 = vrot.lane.b32.xlu0 %v16, 112
  %v345 = vpop.permute.xlu0 %344
  %v346 = vsel %vm18, %v343, 0
  %v348 = vsel %vm18, %v345, 0
  %350 = vmatprep.subr.mxu0 0.0
  %351 = vmatpush1.xpose.msra.mxu0 %v348
  %352 = vmatprep.subr.mxu0 0.0
  %353 = vmatpush1.xpose.msra.mxu0 0.0
  %354 = vmatprep.subr.mxu0 0.0
  %355 = vmatpush1.xpose.msra.mxu0 0.0
  %356 = vmatprep.subr.mxu0 0.0
  %357 = vmatpush1.xpose.msra.mxu0 0.0
  %358 = vmatprep.subr.mxu0 0.0
  %359 = vmatpush1.xpose.msra.mxu0 0.0
  %360 = vmatprep.subr.mxu0 0.0
  %361 = vmatpush1.xpose.msra.mxu0 0.0
  %362 = vmatprep.subr.mxu0 0.0
  %363 = vmatpush1.xpose.msra.mxu0 0.0
  %364 = vmatprep.subr.mxu0 0.0
  %365 = vmatpush1.xpose.msra.mxu0 0.0
  %366 = vmatprep.subr.mxu0 0.0
  %367 = vmatpush1.xpose.msra.mxu0 0.0
  %368 = vmatprep.subr.mxu0 0.0
  %369 = vmatpush1.xpose.msra.mxu0 0.0
  %370 = vmatprep.subr.mxu0 0.0
  %371 = vmatpush1.xpose.msra.mxu0 0.0
  %372 = vmatprep.subr.mxu0 0.0
  %373 = vmatpush1.xpose.msra.mxu0 0.0
  %374 = vmatprep.subr.mxu0 0.0
  %375 = vmatpush1.xpose.msra.mxu0 0.0
  %376 = vmatprep.subr.mxu0 0.0
  %377 = vmatpush1.xpose.msra.mxu0 0.0
  %378 = vmatprep.subr.mxu0 0.0
  %379 = vmatpush1.xpose.msra.mxu0 0.0
  %380 = vmatprep.subr.mxu0 0.0
  %381 = vmatpush1.xpose.msra.mxu0 0.0
  %382 = vmatprep.subr.mxu0 0.0
  %383 = vmatpush1.xpose.msra.mxu0 0.0
  %384 = vmatprep.subr.mxu0 0.0
  %385 = vmatpush1.xpose.msra.mxu0 0.0
  %386 = vmatprep.subr.mxu0 0.0
  %387 = vmatpush1.xpose.msra.mxu0 0.0
  %388 = vmatprep.subr.mxu0 0.0
  %389 = vmatpush1.xpose.msra.mxu0 0.0
  %390 = vmatprep.subr.mxu0 0.0
  %391 = vmatpush1.xpose.msra.mxu0 0.0
  %392 = vmatprep.subr.mxu0 0.0
  %393 = vmatpush1.xpose.msra.mxu0 0.0
  %394 = vmatprep.subr.mxu0 0.0
  %395 = vmatpush1.xpose.msra.mxu0 0.0
  %396 = vmatprep.subr.mxu0 0.0
  %397 = vmatpush1.xpose.msra.mxu0 0.0
  %398 = vmatprep.subr.mxu0 0.0
  %399 = vmatpush1.xpose.msra.mxu0 0.0
  %400 = vmatprep.subr.mxu0 0.0
  %401 = vmatpush1.xpose.msra.mxu0 0.0
  %402 = vmatprep.subr.mxu0 0.0
  %403 = vmatpush1.xpose.msra.mxu0 0.0
  %404 = vmatprep.subr.mxu0 0.0
  %405 = vmatpush1.xpose.msra.mxu0 0.0
  %406 = vmatprep.subr.mxu0 0.0
  %407 = vmatpush1.xpose.msra.mxu0 0.0
  %408 = vmatprep.subr.mxu0 0.0
  %409 = vmatpush1.xpose.msra.mxu0 0.0
  %410 = vmatprep.subr.mxu0 0.0
  %411 = vmatpush1.xpose.msra.mxu0 0.0
  %412 = vmatprep.subr.mxu0 0.0
  %413 = vmatpush1.xpose.msra.mxu0 0.0
  %414 = vmatprep.mubr.f32.mxu0 0.0
  %415 = vmatmul.mubr.f32.gmra.mrb[0].mxu0 %v346
  %v416 = vpop.f32.mrb[0].mxu0
  %v417 = vadd.f32 0.0, %v416
  %v418 = vpop.f32.mrb[0].mxu0
  %419 = vdwg.mxu0
  %v420 = vsel %vm18, %v417, -inf
  %421 = vmax.xlane.f32.xlu0 %v420
  %v422 = vpop.xlane.xlu0 %421
  %v423 = vsub.f32 %v417, %v422
  %v424 = vmul.f32 %v423, 1.442695
  %v425 = vpow.pop %v424
  %v426 = vsel %vm18, %v425, 0.0
  %427 = vadd.xlane.f32.xlu0 %v426
  %v428 = vpop.xlane.xlu0 %427
  %v429 = vrcp.pop %v428
  %v430 = vmul.f32 %v425, %v429
  %v433 = vsel %vm18, %v430, 0
  %435 = vmatprep.subr.mxu0 0.0
  %436 = vmatpush1.msra.mxu0 %v345
  %437 = vmatprep.subr.mxu0 0.0
  %438 = vmatpush1.msra.mxu0 0.0
  %439 = vmatprep.subr.mxu0 0.0
  %440 = vmatpush1.msra.mxu0 0.0
  %441 = vmatprep.subr.mxu0 0.0
  %442 = vmatpush1.msra.mxu0 0.0
  %443 = vmatprep.subr.mxu0 0.0
  %444 = vmatpush1.msra.mxu0 0.0
  %445 = vmatprep.subr.mxu0 0.0
  %446 = vmatpush1.msra.mxu0 0.0
  %447 = vmatprep.subr.mxu0 0.0
  %448 = vmatpush1.msra.mxu0 0.0
  %449 = vmatprep.subr.mxu0 0.0
  %450 = vmatpush1.msra.mxu0 0.0
  %451 = vmatprep.subr.mxu0 0.0
  %452 = vmatpush1.msra.mxu0 0.0
  %453 = vmatprep.subr.mxu0 0.0
  %454 = vmatpush1.msra.mxu0 0.0
  %455 = vmatprep.subr.mxu0 0.0
  %456 = vmatpush1.msra.mxu0 0.0
  %457 = vmatprep.subr.mxu0 0.0
  %458 = vmatpush1.msra.mxu0 0.0
  %459 = vmatprep.subr.mxu0 0.0
  %460 = vmatpush1.msra.mxu0 0.0
  %461 = vmatprep.subr.mxu0 0.0
  %462 = vmatpush1.msra.mxu0 0.0
  %463 = vmatprep.subr.mxu0 0.0
  %464 = vmatpush1.msra.mxu0 0.0
  %465 = vmatprep.subr.mxu0 0.0
  %466 = vmatpush1.msra.mxu0 0.0
  %467 = vmatprep.subr.mxu0 0.0
  %468 = vmatpush1.msra.mxu0 0.0
  %469 = vmatprep.subr.mxu0 0.0
  %470 = vmatpush1.msra.mxu0 0.0
  %471 = vmatprep.subr.mxu0 0.0
  %472 = vmatpush1.msra.mxu0 0.0
  %473 = vmatprep.subr.mxu0 0.0
  %474 = vmatpush1.msra.mxu0 0.0
  %475 = vmatprep.subr.mxu0 0.0
  %476 = vmatpush1.msra.mxu0 0.0
  %477 = vmatprep.subr.mxu0 0.0
  %478 = vmatpush1.msra.mxu0 0.0
  %479 = vmatprep.subr.mxu0 0.0
  %480 = vmatpush1.msra.mxu0 0.0
  %481 = vmatprep.subr.mxu0 0.0
  %482 = vmatpush1.msra.mxu0 0.0
  %483 = vmatprep.subr.mxu0 0.0
  %484 = vmatpush1.msra.mxu0 0.0
  %485 = vmatprep.subr.mxu0 0.0
  %486 = vmatpush1.msra.mxu0 0.0
  %487 = vmatprep.subr.mxu0 0.0
  %488 = vmatpush1.msra.mxu0 0.0
  %489 = vmatprep.subr.mxu0 0.0
  %490 = vmatpush1.msra.mxu0 0.0
  %491 = vmatprep.subr.mxu0 0.0
  %492 = vmatpush1.msra.mxu0 0.0
  %493 = vmatprep.subr.mxu0 0.0
  %494 = vmatpush1.msra.mxu0 0.0
  %495 = vmatprep.subr.mxu0 0.0
  %496 = vmatpush1.msra.mxu0 0.0
  %497 = vmatprep.subr.mxu0 0.0
  %498 = vmatpush1.msra.mxu0 0.0
  %499 = vmatprep.mubr.f32.mxu0 0.0
  %500 = vmatmul.mubr.f32.gmra.mrb[0].mxu0 %v433
  %v501 = vpop.f32.mrb[0].mxu0
  %v502 = vadd.f32 0.0, %v501
  %v503 = vpop.f32.mrb[0].mxu0
  %504 = vdwg.mxu0
  %505 = vrot.lane.b32.xlu0 %v17, 104
  %v506 = vpop.permute.xlu0 %505
  %507 = vrot.lane.b32.xlu0 %v16, 104
  %v508 = vpop.permute.xlu0 %507
  %v509 = vsel %vm18, %v506, 0
  %v511 = vsel %vm18, %v508, 0
  %513 = vmatprep.subr.mxu0 0.0
  %514 = vmatpush1.xpose.msra.mxu0 %v511
  %515 = vmatprep.subr.mxu0 0.0
  %516 = vmatpush1.xpose.msra.mxu0 0.0
  %517 = vmatprep.subr.mxu0 0.0
  %518 = vmatpush1.xpose.msra.mxu0 0.0
  %519 = vmatprep.subr.mxu0 0.0
  %520 = vmatpush1.xpose.msra.mxu0 0.0
  %521 = vmatprep.subr.mxu0 0.0
  %522 = vmatpush1.xpose.msra.mxu0 0.0
  %523 = vmatprep.subr.mxu0 0.0
  %524 = vmatpush1.xpose.msra.mxu0 0.0
  %525 = vmatprep.subr.mxu0 0.0
  %526 = vmatpush1.xpose.msra.mxu0 0.0
  %527 = vmatprep.subr.mxu0 0.0
  %528 = vmatpush1.xpose.msra.mxu0 0.0
  %529 = vmatprep.subr.mxu0 0.0
  %530 = vmatpush1.xpose.msra.mxu0 0.0
  %531 = vmatprep.subr.mxu0 0.0
  %532 = vmatpush1.xpose.msra.mxu0 0.0
  %533 = vmatprep.subr.mxu0 0.0
  %534 = vmatpush1.xpose.msra.mxu0 0.0
  %535 = vmatprep.subr.mxu0 0.0
  %536 = vmatpush1.xpose.msra.mxu0 0.0
  %537 = vmatprep.subr.mxu0 0.0
  %538 = vmatpush1.xpose.msra.mxu0 0.0
  %539 = vmatprep.subr.mxu0 0.0
  %540 = vmatpush1.xpose.msra.mxu0 0.0
  %541 = vmatprep.subr.mxu0 0.0
  %542 = vmatpush1.xpose.msra.mxu0 0.0
  %543 = vmatprep.subr.mxu0 0.0
  %544 = vmatpush1.xpose.msra.mxu0 0.0
  %545 = vmatprep.subr.mxu0 0.0
  %546 = vmatpush1.xpose.msra.mxu0 0.0
  %547 = vmatprep.subr.mxu0 0.0
  %548 = vmatpush1.xpose.msra.mxu0 0.0
  %549 = vmatprep.subr.mxu0 0.0
  %550 = vmatpush1.xpose.msra.mxu0 0.0
  %551 = vmatprep.subr.mxu0 0.0
  %552 = vmatpush1.xpose.msra.mxu0 0.0
  %553 = vmatprep.subr.mxu0 0.0
  %554 = vmatpush1.xpose.msra.mxu0 0.0
  %555 = vmatprep.subr.mxu0 0.0
  %556 = vmatpush1.xpose.msra.mxu0 0.0
  %557 = vmatprep.subr.mxu0 0.0
  %558 = vmatpush1.xpose.msra.mxu0 0.0
  %559 = vmatprep.subr.mxu0 0.0
  %560 = vmatpush1.xpose.msra.mxu0 0.0
  %561 = vmatprep.subr.mxu0 0.0
  %562 = vmatpush1.xpose.msra.mxu0 0.0
  %563 = vmatprep.subr.mxu0 0.0
  %564 = vmatpush1.xpose.msra.mxu0 0.0
  %565 = vmatprep.subr.mxu0 0.0
  %566 = vmatpush1.xpose.msra.mxu0 0.0
  %567 = vmatprep.subr.mxu0 0.0
  %568 = vmatpush1.xpose.msra.mxu0 0.0
  %569 = vmatprep.subr.mxu0 0.0
  %570 = vmatpush1.xpose.msra.mxu0 0.0
  %571 = vmatprep.subr.mxu0 0.0
  %572 = vmatpush1.xpose.msra.mxu0 0.0
  %573 = vmatprep.subr.mxu0 0.0
  %574 = vmatpush1.xpose.msra.mxu0 0.0
  %575 = vmatprep.subr.mxu0 0.0
  %576 = vmatpush1.xpose.msra.mxu0 0.0
  %577 = vmatprep.mubr.f32.mxu0 0.0
  %578 = vmatmul.mubr.f32.gmra.mrb[0].mxu0 %v509
  %v579 = vpop.f32.mrb[0].mxu0
  %v580 = vadd.f32 0.0, %v579
  %v581 = vpop.f32.mrb[0].mxu0
  %582 = vdwg.mxu0
  %v583 = vsel %vm18, %v580, -inf
  %584 = vmax.xlane.f32.xlu0 %v583
  %v585 = vpop.xlane.xlu0 %584
  %v586 = vsub.f32 %v580, %v585
  %v587 = vmul.f32 %v586, 1.442695
  %v588 = vpow.pop %v587
  %v589 = vsel %vm18, %v588, 0.0
  %590 = vadd.xlane.f32.xlu0 %v589
  %v591 = vpop.xlane.xlu0 %590
  %v592 = vrcp.pop %v591
  %v593 = vmul.f32 %v588, %v592
  %v596 = vsel %vm18, %v593, 0
  %598 = vmatprep.subr.mxu0 0.0
  %599 = vmatpush1.msra.mxu0 %v508
  %600 = vmatprep.subr.mxu0 0.0
  %601 = vmatpush1.msra.mxu0 0.0
  %602 = vmatprep.subr.mxu0 0.0
  %603 = vmatpush1.msra.mxu0 0.0
  %604 = vmatprep.subr.mxu0 0.0
  %605 = vmatpush1.msra.mxu0 0.0
  %606 = vmatprep.subr.mxu0 0.0
  %607 = vmatpush1.msra.mxu0 0.0
  %608 = vmatprep.subr.mxu0 0.0
  %609 = vmatpush1.msra.mxu0 0.0
  %610 = vmatprep.subr.mxu0 0.0
  %611 = vmatpush1.msra.mxu0 0.0
  %612 = vmatprep.subr.mxu0 0.0
  %613 = vmatpush1.msra.mxu0 0.0
  %614 = vmatprep.subr.mxu0 0.0
  %615 = vmatpush1.msra.mxu0 0.0
  %616 = vmatprep.subr.mxu0 0.0
  %617 = vmatpush1.msra.mxu0 0.0
  %618 = vmatprep.subr.mxu0 0.0
  %619 = vmatpush1.msra.mxu0 0.0
  %620 = vmatprep.subr.mxu0 0.0
  %621 = vmatpush1.msra.mxu0 0.0
  %622 = vmatprep.subr.mxu0 0.0
  %623 = vmatpush1.msra.mxu0 0.0
  %624 = vmatprep.subr.mxu0 0.0
  %625 = vmatpush1.msra.mxu0 0.0
  %626 = vmatprep.subr.mxu0 0.0
  %627 = vmatpush1.msra.mxu0 0.0
  %628 = vmatprep.subr.mxu0 0.0
  %629 = vmatpush1.msra.mxu0 0.0
  %630 = vmatprep.subr.mxu0 0.0
  %631 = vmatpush1.msra.mxu0 0.0
  %632 = vmatprep.subr.mxu0 0.0
  %633 = vmatpush1.msra.mxu0 0.0
  %634 = vmatprep.subr.mxu0 0.0
  %635 = vmatpush1.msra.mxu0 0.0
  %636 = vmatprep.subr.mxu0 0.0
  %637 = vmatpush1.msra.mxu0 0.0
  %638 = vmatprep.subr.mxu0 0.0
  %639 = vmatpush1.msra.mxu0 0.0
  %640 = vmatprep.subr.mxu0 0.0
  %641 = vmatpush1.msra.mxu0 0.0
  %642 = vmatprep.subr.mxu0 0.0
  %643 = vmatpush1.msra.mxu0 0.0
  %644 = vmatprep.subr.mxu0 0.0
  %645 = vmatpush1.msra.mxu0 0.0
  %646 = vmatprep.subr.mxu0 0.0
  %647 = vmatpush1.msra.mxu0 0.0
  %648 = vmatprep.subr.mxu0 0.0
  %649 = vmatpush1.msra.mxu0 0.0
  %650 = vmatprep.subr.mxu0 0.0
  %651 = vmatpush1.msra.mxu0 0.0
  %652 = vmatprep.subr.mxu0 0.0
  %653 = vmatpush1.msra.mxu0 0.0
  %654 = vmatprep.subr.mxu0 0.0
  %655 = vmatpush1.msra.mxu0 0.0
  %656 = vmatprep.subr.mxu0 0.0
  %657 = vmatpush1.msra.mxu0 0.0
  %658 = vmatprep.subr.mxu0 0.0
  %659 = vmatpush1.msra.mxu0 0.0
  %660 = vmatprep.subr.mxu0 0.0
  %661 = vmatpush1.msra.mxu0 0.0
  %662 = vmatprep.mubr.f32.mxu0 0.0
  %663 = vmatmul.mubr.f32.gmra.mrb[0].mxu0 %v596
  %v664 = vpop.f32.mrb[0].mxu0
  %v665 = vadd.f32 0.0, %v664
  %v666 = vpop.f32.mrb[0].mxu0
  %667 = vdwg.mxu0
  %669 = vrot.lane.b32.xlu0 %v339, 8
  %v670 = vpop.permute.xlu0 %669
  %673 = vrot.lane.b32.xlu0 %v502, 16
  %v674 = vpop.permute.xlu0 %673
  %677 = vrot.lane.b32.xlu0 %v665, 24
  %v678 = vpop.permute.xlu0 %677
  %v680 = vsel %vm18, %v176, %v670
  %vm681 = vcmask 130048
  %v682 = vsel %vm681, %v680, %v674
  %vm683 = vcmask 195584
  %v684 = vsel %vm683, %v682, %v678
  %v685 = vadd.f32 %v16, %v684
  %vm686 = vcmask 261120
  %v687 = vsel %vm686, %v685, 0.0
  %688 = vadd.xlane.f32.xlu0 %v687
  %v689 = vpop.xlane.xlu0 %688
  %v690 = vrcp.pop 32.0
  %v691 = vmul.f32 %v689, %v690
  %v692 = vsub.f32 %v685, %v691
  %v693 = vmul.f32 %v692, %v692
  %v694 = vsel %vm686, %v693, 0.0
  %695 = vadd.xlane.f32.xlu0 %v694
  %v696 = vpop.xlane.xlu0 %695
  %v697 = vmul.f32 %v696, %v690
  %v698 = vadd.f32 %v697, 1e-05
  %v699 = vrsqrt.pop %v698
  %v700 = vmul.f32 %v692, %v699
  %v702 = vlaneseq
  %v703 = vshrl.u32 %v702, 7
  %v704 = vsub.s32 0, %v703
  %v705 = vrot.slane %v14, %v704
  %v707 = vmul.f32 %v700, %v705
  %v709 = vlaneseq
  %v710 = vshrl.u32 %v709, 7
  %v711 = vsub.s32 0, %v710
  %v712 = vrot.slane %v15, %v711
  %v714 = vadd.f32 %v707, %v712
  %715 = vst.msk [vmem:[%s3] sm:$0xff] %vm686, %v714
  %s716 = scalar_lea.vmem %s0, 8
  %v717 = vld [vmem:[%s716] sm:$0xff]
  %v718 = vmul.f32 %v717, 0.35355338
  %v720 = vsel %vm18, %v718, 0
  %v723 = vsel %vm18, %v717, 0
  %725 = vmatprep.subr.mxu0 0.0
  %726 = vmatpush1.xpose.msra.mxu0 %v723
  %727 = vmatprep.subr.mxu0 0.0
  %728 = vmatpush1.xpose.msra.mxu0 0.0
  %729 = vmatprep.subr.mxu0 0.0
  %730 = vmatpush1.xpose.msra.mxu0 0.0
  %731 = vmatprep.subr.mxu0 0.0
  %732 = vmatpush1.xpose.msra.mxu0 0.0
  %733 = vmatprep.subr.mxu0 0.0
  %734 = vmatpush1.xpose.msra.mxu0 0.0
  %735 = vmatprep.subr.mxu0 0.0
  %736 = vmatpush1.xpose.msra.mxu0 0.0
  %737 = vmatprep.subr.mxu0 0.0
  %738 = vmatpush1.xpose.msra.mxu0 0.0
  %739 = vmatprep.subr.mxu0 0.0
  %740 = vmatpush1.xpose.msra.mxu0 0.0
  %741 = vmatprep.subr.mxu0 0.0
  %742 = vmatpush1.xpose.msra.mxu0 0.0
  %743 = vmatprep.subr.mxu0 0.0
  %744 = vmatpush1.xpose.msra.mxu0 0.0
  %745 = vmatprep.subr.mxu0 0.0
  %746 = vmatpush1.xpose.msra.mxu0 0.0
  %747 = vmatprep.subr.mxu0 0.0
  %748 = vmatpush1.xpose.msra.mxu0 0.0
  %749 = vmatprep.subr.mxu0 0.0
  %750 = vmatpush1.xpose.msra.mxu0 0.0
  %751 = vmatprep.subr.mxu0 0.0
  %752 = vmatpush1.xpose.msra.mxu0 0.0
  %753 = vmatprep.subr.mxu0 0.0
  %754 = vmatpush1.xpose.msra.mxu0 0.0
  %755 = vmatprep.subr.mxu0 0.0
  %756 = vmatpush1.xpose.msra.mxu0 0.0
  %757 = vmatprep.subr.mxu0 0.0
  %758 = vmatpush1.xpose.msra.mxu0 0.0
  %759 = vmatprep.subr.mxu0 0.0
  %760 = vmatpush1.xpose.msra.mxu0 0.0
  %761 = vmatprep.subr.mxu0 0.0
  %762 = vmatpush1.xpose.msra.mxu0 0.0
  %763 = vmatprep.subr.mxu0 0.0
  %764 = vmatpush1.xpose.msra.mxu0 0.0
  %765 = vmatprep.subr.mxu0 0.0
  %766 = vmatpush1.xpose.msra.mxu0 0.0
  %767 = vmatprep.subr.mxu0 0.0
  %768 = vmatpush1.xpose.msra.mxu0 0.0
  %769 = vmatprep.subr.mxu0 0.0
  %770 = vmatpush1.xpose.msra.mxu0 0.0
  %771 = vmatprep.subr.mxu0 0.0
  %772 = vmatpush1.xpose.msra.mxu0 0.0
  %773 = vmatprep.subr.mxu0 0.0
  %774 = vmatpush1.xpose.msra.mxu0 0.0
  %775 = vmatprep.subr.mxu0 0.0
  %776 = vmatpush1.xpose.msra.mxu0 0.0
  %777 = vmatprep.subr.mxu0 0.0
  %778 = vmatpush1.xpose.msra.mxu0 0.0
  %779 = vmatprep.subr.mxu0 0.0
  %780 = vmatpush1.xpose.msra.mxu0 0.0
  %781 = vmatprep.subr.mxu0 0.0
  %782 = vmatpush1.xpose.msra.mxu0 0.0
  %783 = vmatprep.subr.mxu0 0.0
  %784 = vmatpush1.xpose.msra.mxu0 0.0
  %785 = vmatprep.subr.mxu0 0.0
  %786 = vmatpush1.xpose.msra.mxu0 0.0
  %787 = vmatprep.subr.mxu0 0.0
  %788 = vmatpush1.xpose.msra.mxu0 0.0
  %789 = vmatprep.mubr.f32.mxu0 0.0
  %790 = vmatmul.mubr.f32.gmra.mrb[0].mxu0 %v720
  %v791 = vpop.f32.mrb[0].mxu0
  %v792 = vadd.f32 0.0, %v791
  %v793 = vpop.f32.mrb[0].mxu0
  %794 = vdwg.mxu0
  %v795 = vsel %vm18, %v792, -inf
  %796 = vmax.xlane.f32.xlu0 %v795
  %v797 = vpop.xlane.xlu0 %796
  %v798 = vsub.f32 %v792, %v797
  %v799 = vmul.f32 %v798, 1.442695
  %v800 = vpow.pop %v799
  %v801 = vsel %vm18, %v800, 0.0
  %802 = vadd.xlane.f32.xlu0 %v801
  %v803 = vpop.xlane.xlu0 %802
  %v804 = vrcp.pop %v803
  %v805 = vmul.f32 %v800, %v804
  %v807 = vsel %vm18, %v805, 0
  %809 = vmatprep.subr.mxu0 0.0
  %810 = vmatpush1.msra.mxu0 %v717
  %811 = vmatprep.subr.mxu0 0.0
  %812 = vmatpush1.msra.mxu0 0.0
  %813 = vmatprep.subr.mxu0 0.0
  %814 = vmatpush1.msra.mxu0 0.0
  %815 = vmatprep.subr.mxu0 0.0
  %816 = vmatpush1.msra.mxu0 0.0
  %817 = vmatprep.subr.mxu0 0.0
  %818 = vmatpush1.msra.mxu0 0.0
  %819 = vmatprep.subr.mxu0 0.0
  %820 = vmatpush1.msra.mxu0 0.0
  %821 = vmatprep.subr.mxu0 0.0
  %822 = vmatpush1.msra.mxu0 0.0
  %823 = vmatprep.subr.mxu0 0.0
  %824 = vmatpush1.msra.mxu0 0.0
  %825 = vmatprep.subr.mxu0 0.0
  %826 = vmatpush1.msra.mxu0 0.0
  %827 = vmatprep.subr.mxu0 0.0
  %828 = vmatpush1.msra.mxu0 0.0
  %829 = vmatprep.subr.mxu0 0.0
  %830 = vmatpush1.msra.mxu0 0.0
  %831 = vmatprep.subr.mxu0 0.0
  %832 = vmatpush1.msra.mxu0 0.0
  %833 = vmatprep.subr.mxu0 0.0
  %834 = vmatpush1.msra.mxu0 0.0
  %835 = vmatprep.subr.mxu0 0.0
  %836 = vmatpush1.msra.mxu0 0.0
  %837 = vmatprep.subr.mxu0 0.0
  %838 = vmatpush1.msra.mxu0 0.0
  %839 = vmatprep.subr.mxu0 0.0
  %840 = vmatpush1.msra.mxu0 0.0
  %841 = vmatprep.subr.mxu0 0.0
  %842 = vmatpush1.msra.mxu0 0.0
  %843 = vmatprep.subr.mxu0 0.0
  %844 = vmatpush1.msra.mxu0 0.0
  %845 = vmatprep.subr.mxu0 0.0
  %846 = vmatpush1.msra.mxu0 0.0
  %847 = vmatprep.subr.mxu0 0.0
  %848 = vmatpush1.msra.mxu0 0.0
  %849 = vmatprep.subr.mxu0 0.0
  %850 = vmatpush1.msra.mxu0 0.0
  %851 = vmatprep.subr.mxu0 0.0
  %852 = vmatpush1.msra.mxu0 0.0
  %853 = vmatprep.subr.mxu0 0.0
  %854 = vmatpush1.msra.mxu0 0.0
  %855 = vmatprep.subr.mxu0 0.0
  %856 = vmatpush1.msra.mxu0 0.0
  %857 = vmatprep.subr.mxu0 0.0
  %858 = vmatpush1.msra.mxu0 0.0
  %859 = vmatprep.subr.mxu0 0.0
  %860 = vmatpush1.msra.mxu0 0.0
  %861 = vmatprep.subr.mxu0 0.0
  %862 = vmatpush1.msra.mxu0 0.0
  %863 = vmatprep.subr.mxu0 0.0
  %864 = vmatpush1.msra.mxu0 0.0
  %865 = vmatprep.subr.mxu0 0.0
  %866 = vmatpush1.msra.mxu0 0.0
  %867 = vmatprep.subr.mxu0 0.0
  %868 = vmatpush1.msra.mxu0 0.0
  %869 = vmatprep.subr.mxu0 0.0
  %870 = vmatpush1.msra.mxu0 0.0
  %871 = vmatprep.subr.mxu0 0.0
  %872 = vmatpush1.msra.mxu0 0.0
  %873 = vmatprep.mubr.f32.mxu0 0.0
  %874 = vmatmul.mubr.f32.gmra.mrb[0].mxu0 %v807
  %v875 = vpop.f32.mrb[0].mxu0
  %v876 = vadd.f32 0.0, %v875
  %v877 = vpop.f32.mrb[0].mxu0
  %878 = vdwg.mxu0
  %879 = vrot.lane.b32.xlu0 %v718, 120
  %v880 = vpop.permute.xlu0 %879
  %881 = vrot.lane.b32.xlu0 %v717, 120
  %v882 = vpop.permute.xlu0 %881
  %v883 = vsel %vm18, %v880, 0
  %v885 = vsel %vm18, %v882, 0
  %887 = vmatprep.subr.mxu0 0.0
  %888 = vmatpush1.xpose.msra.mxu0 %v885
  %889 = vmatprep.subr.mxu0 0.0
  %890 = vmatpush1.xpose.msra.mxu0 0.0
  %891 = vmatprep.subr.mxu0 0.0
  %892 = vmatpush1.xpose.msra.mxu0 0.0
  %893 = vmatprep.subr.mxu0 0.0
  %894 = vmatpush1.xpose.msra.mxu0 0.0
  %895 = vmatprep.subr.mxu0 0.0
  %896 = vmatpush1.xpose.msra.mxu0 0.0
  %897 = vmatprep.subr.mxu0 0.0
  %898 = vmatpush1.xpose.msra.mxu0 0.0
  %899 = vmatprep.subr.mxu0 0.0
  %900 = vmatpush1.xpose.msra.mxu0 0.0
  %901 = vmatprep.subr.mxu0 0.0
  %902 = vmatpush1.xpose.msra.mxu0 0.0
  %903 = vmatprep.subr.mxu0 0.0
  %904 = vmatpush1.xpose.msra.mxu0 0.0
  %905 = vmatprep.subr.mxu0 0.0
  %906 = vmatpush1.xpose.msra.mxu0 0.0
  %907 = vmatprep.subr.mxu0 0.0
  %908 = vmatpush1.xpose.msra.mxu0 0.0
  %909 = vmatprep.subr.mxu0 0.0
  %910 = vmatpush1.xpose.msra.mxu0 0.0
  %911 = vmatprep.subr.mxu0 0.0
  %912 = vmatpush1.xpose.msra.mxu0 0.0
  %913 = vmatprep.subr.mxu0 0.0
  %914 = vmatpush1.xpose.msra.mxu0 0.0
  %915 = vmatprep.subr.mxu0 0.0
  %916 = vmatpush1.xpose.msra.mxu0 0.0
  %917 = vmatprep.subr.mxu0 0.0
  %918 = vmatpush1.xpose.msra.mxu0 0.0
  %919 = vmatprep.subr.mxu0 0.0
  %920 = vmatpush1.xpose.msra.mxu0 0.0
  %921 = vmatprep.subr.mxu0 0.0
  %922 = vmatpush1.xpose.msra.mxu0 0.0
  %923 = vmatprep.subr.mxu0 0.0
  %924 = vmatpush1.xpose.msra.mxu0 0.0
  %925 = vmatprep.subr.mxu0 0.0
  %926 = vmatpush1.xpose.msra.mxu0 0.0
  %927 = vmatprep.subr.mxu0 0.0
  %928 = vmatpush1.xpose.msra.mxu0 0.0
  %929 = vmatprep.subr.mxu0 0.0
  %930 = vmatpush1.xpose.msra.mxu0 0.0
  %931 = vmatprep.subr.mxu0 0.0
  %932 = vmatpush1.xpose.msra.mxu0 0.0
  %933 = vmatprep.subr.mxu0 0.0
  %934 = vmatpush1.xpose.msra.mxu0 0.0
  %935 = vmatprep.subr.mxu0 0.0
  %936 = vmatpush1.xpose.msra.mxu0 0.0
  %937 = vmatprep.subr.mxu0 0.0
  %938 = vmatpush1.xpose.msra.mxu0 0.0
  %939 = vmatprep.subr.mxu0 0.0
  %940 = vmatpush1.xpose.msra.mxu0 0.0
  %941 = vmatprep.subr.mxu0 0.0
  %942 = vmatpush1.xpose.msra.mxu0 0.0
  %943 = vmatprep.subr.mxu0 0.0
  %944 = vmatpush1.xpose.msra.mxu0 0.0
  %945 = vmatprep.subr.mxu0 0.0
  %946 = vmatpush1.xpose.msra.mxu0 0.0
  %947 = vmatprep.subr.mxu0 0.0
  %948 = vmatpush1.xpose.msra.mxu0 0.0
  %949 = vmatprep.subr.mxu0 0.0
  %950 = vmatpush1.xpose.msra.mxu0 0.0
  %951 = vmatprep.mubr.f32.mxu0 0.0
  %952 = vmatmul.mubr.f32.gmra.mrb[0].mxu0 %v883
  %v953 = vpop.f32.mrb[0].mxu0
  %v954 = vadd.f32 0.0, %v953
  %v955 = vpop.f32.mrb[0].mxu0
  %956 = vdwg.mxu0
  %v957 = vsel %vm18, %v954, -inf
  %958 = vmax.xlane.f32.xlu0 %v957
  %v959 = vpop.xlane.xlu0 %958
  %v960 = vsub.f32 %v954, %v959
  %v961 = vmul.f32 %v960, 1.442695
  %v962 = vpow.pop %v961
  %v963 = vsel %vm18, %v962, 0.0
  %964 = vadd.xlane.f32.xlu0 %v963
  %v965 = vpop.xlane.xlu0 %964
  %v966 = vrcp.pop %v965
  %v967 = vmul.f32 %v962, %v966
  %v970 = vsel %vm18, %v967, 0
  %972 = vmatprep.subr.mxu0 0.0
  %973 = vmatpush1.msra.mxu0 %v882
  %974 = vmatprep.subr.mxu0 0.0
  %975 = vmatpush1.msra.mxu0 0.0
  %976 = vmatprep.subr.mxu0 0.0
  %977 = vmatpush1.msra.mxu0 0.0
  %978 = vmatprep.subr.mxu0 0.0
  %979 = vmatpush1.msra.mxu0 0.0
  %980 = vmatprep.subr.mxu0 0.0
  %981 = vmatpush1.msra.mxu0 0.0
  %982 = vmatprep.subr.mxu0 0.0
  %983 = vmatpush1.msra.mxu0 0.0
  %984 = vmatprep.subr.mxu0 0.0
  %985 = vmatpush1.msra.mxu0 0.0
  %986 = vmatprep.subr.mxu0 0.0
  %987 = vmatpush1.msra.mxu0 0.0
  %988 = vmatprep.subr.mxu0 0.0
  %989 = vmatpush1.msra.mxu0 0.0
  %990 = vmatprep.subr.mxu0 0.0
  %991 = vmatpush1.msra.mxu0 0.0
  %992 = vmatprep.subr.mxu0 0.0
  %993 = vmatpush1.msra.mxu0 0.0
  %994 = vmatprep.subr.mxu0 0.0
  %995 = vmatpush1.msra.mxu0 0.0
  %996 = vmatprep.subr.mxu0 0.0
  %997 = vmatpush1.msra.mxu0 0.0
  %998 = vmatprep.subr.mxu0 0.0
  %999 = vmatpush1.msra.mxu0 0.0
  %1000 = vmatprep.subr.mxu0 0.0
  %1001 = vmatpush1.msra.mxu0 0.0
  %1002 = vmatprep.subr.mxu0 0.0
  %1003 = vmatpush1.msra.mxu0 0.0
  %1004 = vmatprep.subr.mxu0 0.0
  %1005 = vmatpush1.msra.mxu0 0.0
  %1006 = vmatprep.subr.mxu0 0.0
  %1007 = vmatpush1.msra.mxu0 0.0
  %1008 = vmatprep.subr.mxu0 0.0
  %1009 = vmatpush1.msra.mxu0 0.0
  %1010 = vmatprep.subr.mxu0 0.0
  %1011 = vmatpush1.msra.mxu0 0.0
  %1012 = vmatprep.subr.mxu0 0.0
  %1013 = vmatpush1.msra.mxu0 0.0
  %1014 = vmatprep.subr.mxu0 0.0
  %1015 = vmatpush1.msra.mxu0 0.0
  %1016 = vmatprep.subr.mxu0 0.0
  %1017 = vmatpush1.msra.mxu0 0.0
  %1018 = vmatprep.subr.mxu0 0.0
  %1019 = vmatpush1.msra.mxu0 0.0
  %1020 = vmatprep.subr.mxu0 0.0
  %1021 = vmatpush1.msra.mxu0 0.0
  %1022 = vmatprep.subr.mxu0 0.0
  %1023 = vmatpush1.msra.mxu0 0.0
  %1024 = vmatprep.subr.mxu0 0.0
  %1025 = vmatpush1.msra.mxu0 0.0
  %1026 = vmatprep.subr.mxu0 0.0
  %1027 = vmatpush1.msra.mxu0 0.0
  %1028 = vmatprep.subr.mxu0 0.0
  %1029 = vmatpush1.msra.mxu0 0.0
  %1030 = vmatprep.subr.mxu0 0.0
  %1031 = vmatpush1.msra.mxu0 0.0
  %1032 = vmatprep.subr.mxu0 0.0
  %1033 = vmatpush1.msra.mxu0 0.0
  %1034 = vmatprep.subr.mxu0 0.0
  %1035 = vmatpush1.msra.mxu0 0.0
  %1036 = vmatprep.mubr.f32.mxu0 0.0
  %1037 = vmatmul.mubr.f32.gmra.mrb[0].mxu0 %v970
  %v1038 = vpop.f32.mrb[0].mxu0
  %v1039 = vadd.f32 0.0, %v1038
  %v1040 = vpop.f32.mrb[0].mxu0
  %1041 = vdwg.mxu0
  %1042 = vrot.lane.b32.xlu0 %v718, 112
  %v1043 = vpop.permute.xlu0 %1042
  %1044 = vrot.lane.b32.xlu0 %v717, 112
  %v1045 = vpop.permute.xlu0 %1044
  %v1046 = vsel %vm18, %v1043, 0
  %v1048 = vsel %vm18, %v1045, 0
  %1050 = vmatprep.subr.mxu0 0.0
  %1051 = vmatpush1.xpose.msra.mxu0 %v1048
  %1052 = vmatprep.subr.mxu0 0.0
  %1053 = vmatpush1.xpose.msra.mxu0 0.0
  %1054 = vmatprep.subr.mxu0 0.0
  %1055 = vmatpush1.xpose.msra.mxu0 0.0
  %1056 = vmatprep.subr.mxu0 0.0
  %1057 = vmatpush1.xpose.msra.mxu0 0.0
  %1058 = vmatprep.subr.mxu0 0.0
  %1059 = vmatpush1.xpose.msra.mxu0 0.0
  %1060 = vmatprep.subr.mxu0 0.0
  %1061 = vmatpush1.xpose.msra.mxu0 0.0
  %1062 = vmatprep.subr.mxu0 0.0
  %1063 = vmatpush1.xpose.msra.mxu0 0.0
  %1064 = vmatprep.subr.mxu0 0.0
  %1065 = vmatpush1.xpose.msra.mxu0 0.0
  %1066 = vmatprep.subr.mxu0 0.0
  %1067 = vmatpush1.xpose.msra.mxu0 0.0
  %1068 = vmatprep.subr.mxu0 0.0
  %1069 = vmatpush1.xpose.msra.mxu0 0.0
  %1070 = vmatprep.subr.mxu0 0.0
  %1071 = vmatpush1.xpose.msra.mxu0 0.0
  %1072 = vmatprep.subr.mxu0 0.0
  %1073 = vmatpush1.xpose.msra.mxu0 0.0
  %1074 = vmatprep.subr.mxu0 0.0
  %1075 = vmatpush1.xpose.msra.mxu0 0.0
  %1076 = vmatprep.subr.mxu0 0.0
  %1077 = vmatpush1.xpose.msra.mxu0 0.0
  %1078 = vmatprep.subr.mxu0 0.0
  %1079 = vmatpush1.xpose.msra.mxu0 0.0
  %1080 = vmatprep.subr.mxu0 0.0
  %1081 = vmatpush1.xpose.msra.mxu0 0.0
  %1082 = vmatprep.subr.mxu0 0.0
  %1083 = vmatpush1.xpose.msra.mxu0 0.0
  %1084 = vmatprep.subr.mxu0 0.0
  %1085 = vmatpush1.xpose.msra.mxu0 0.0
  %1086 = vmatprep.subr.mxu0 0.0
  %1087 = vmatpush1.xpose.msra.mxu0 0.0
  %1088 = vmatprep.subr.mxu0 0.0
  %1089 = vmatpush1.xpose.msra.mxu0 0.0
  %1090 = vmatprep.subr.mxu0 0.0
  %1091 = vmatpush1.xpose.msra.mxu0 0.0
  %1092 = vmatprep.subr.mxu0 0.0
  %1093 = vmatpush1.xpose.msra.mxu0 0.0
  %1094 = vmatprep.subr.mxu0 0.0
  %1095 = vmatpush1.xpose.msra.mxu0 0.0
  %1096 = vmatprep.subr.mxu0 0.0
  %1097 = vmatpush1.xpose.msra.mxu0 0.0
  %1098 = vmatprep.subr.mxu0 0.0
  %1099 = vmatpush1.xpose.msra.mxu0 0.0
  %1100 = vmatprep.subr.mxu0 0.0
  %1101 = vmatpush1.xpose.msra.mxu0 0.0
  %1102 = vmatprep.subr.mxu0 0.0
  %1103 = vmatpush1.xpose.msra.mxu0 0.0
  %1104 = vmatprep.subr.mxu0 0.0
  %1105 = vmatpush1.xpose.msra.mxu0 0.0
  %1106 = vmatprep.subr.mxu0 0.0
  %1107 = vmatpush1.xpose.msra.mxu0 0.0
  %1108 = vmatprep.subr.mxu0 0.0
  %1109 = vmatpush1.xpose.msra.mxu0 0.0
  %1110 = vmatprep.subr.mxu0 0.0
  %1111 = vmatpush1.xpose.msra.mxu0 0.0
  %1112 = vmatprep.subr.mxu0 0.0
  %1113 = vmatpush1.xpose.msra.mxu0 0.0
  %1114 = vmatprep.mubr.f32.mxu0 0.0
  %1115 = vmatmul.mubr.f32.gmra.mrb[0].mxu0 %v1046
  %v1116 = vpop.f32.mrb[0].mxu0
  %v1117 = vadd.f32 0.0, %v1116
  %v1118 = vpop.f32.mrb[0].mxu0
  %1119 = vdwg.mxu0
  %v1120 = vsel %vm18, %v1117, -inf
  %1121 = vmax.xlane.f32.xlu0 %v1120
  %v1122 = vpop.xlane.xlu0 %1121
  %v1123 = vsub.f32 %v1117, %v1122
  %v1124 = vmul.f32 %v1123, 1.442695
  %v1125 = vpow.pop %v1124
  %v1126 = vsel %vm18, %v1125, 0.0
  %1127 = vadd.xlane.f32.xlu0 %v1126
  %v1128 = vpop.xlane.xlu0 %1127
  %v1129 = vrcp.pop %v1128
  %v1130 = vmul.f32 %v1125, %v1129
  %v1133 = vsel %vm18, %v1130, 0
  %1135 = vmatprep.subr.mxu0 0.0
  %1136 = vmatpush1.msra.mxu0 %v1045
  %1137 = vmatprep.subr.mxu0 0.0
  %1138 = vmatpush1.msra.mxu0 0.0
  %1139 = vmatprep.subr.mxu0 0.0
  %1140 = vmatpush1.msra.mxu0 0.0
  %1141 = vmatprep.subr.mxu0 0.0
  %1142 = vmatpush1.msra.mxu0 0.0
  %1143 = vmatprep.subr.mxu0 0.0
  %1144 = vmatpush1.msra.mxu0 0.0
  %1145 = vmatprep.subr.mxu0 0.0
  %1146 = vmatpush1.msra.mxu0 0.0
  %1147 = vmatprep.subr.mxu0 0.0
  %1148 = vmatpush1.msra.mxu0 0.0
  %1149 = vmatprep.subr.mxu0 0.0
  %1150 = vmatpush1.msra.mxu0 0.0
  %1151 = vmatprep.subr.mxu0 0.0
  %1152 = vmatpush1.msra.mxu0 0.0
  %1153 = vmatprep.subr.mxu0 0.0
  %1154 = vmatpush1.msra.mxu0 0.0
  %1155 = vmatprep.subr.mxu0 0.0
  %1156 = vmatpush1.msra.mxu0 0.0
  %1157 = vmatprep.subr.mxu0 0.0
  %1158 = vmatpush1.msra.mxu0 0.0
  %1159 = vmatprep.subr.mxu0 0.0
  %1160 = vmatpush1.msra.mxu0 0.0
  %1161 = vmatprep.subr.mxu0 0.0
  %1162 = vmatpush1.msra.mxu0 0.0
  %1163 = vmatprep.subr.mxu0 0.0
  %1164 = vmatpush1.msra.mxu0 0.0
  %1165 = vmatprep.subr.mxu0 0.0
  %1166 = vmatpush1.msra.mxu0 0.0
  %1167 = vmatprep.subr.mxu0 0.0
  %1168 = vmatpush1.msra.mxu0 0.0
  %1169 = vmatprep.subr.mxu0 0.0
  %1170 = vmatpush1.msra.mxu0 0.0
  %1171 = vmatprep.subr.mxu0 0.0
  %1172 = vmatpush1.msra.mxu0 0.0
  %1173 = vmatprep.subr.mxu0 0.0
  %1174 = vmatpush1.msra.mxu0 0.0
  %1175 = vmatprep.subr.mxu0 0.0
  %1176 = vmatpush1.msra.mxu0 0.0
  %1177 = vmatprep.subr.mxu0 0.0
  %1178 = vmatpush1.msra.mxu0 0.0
  %1179 = vmatprep.subr.mxu0 0.0
  %1180 = vmatpush1.msra.mxu0 0.0
  %1181 = vmatprep.subr.mxu0 0.0
  %1182 = vmatpush1.msra.mxu0 0.0
  %1183 = vmatprep.subr.mxu0 0.0
  %1184 = vmatpush1.msra.mxu0 0.0
  %1185 = vmatprep.subr.mxu0 0.0
  %1186 = vmatpush1.msra.mxu0 0.0
  %1187 = vmatprep.subr.mxu0 0.0
  %1188 = vmatpush1.msra.mxu0 0.0
  %1189 = vmatprep.subr.mxu0 0.0
  %1190 = vmatpush1.msra.mxu0 0.0
  %1191 = vmatprep.subr.mxu0 0.0
  %1192 = vmatpush1.msra.mxu0 0.0
  %1193 = vmatprep.subr.mxu0 0.0
  %1194 = vmatpush1.msra.mxu0 0.0
  %1195 = vmatprep.subr.mxu0 0.0
  %1196 = vmatpush1.msra.mxu0 0.0
  %1197 = vmatprep.subr.mxu0 0.0
  %1198 = vmatpush1.msra.mxu0 0.0
  %1199 = vmatprep.mubr.f32.mxu0 0.0
  %1200 = vmatmul.mubr.f32.gmra.mrb[0].mxu0 %v1133
  %v1201 = vpop.f32.mrb[0].mxu0
  %v1202 = vadd.f32 0.0, %v1201
  %v1203 = vpop.f32.mrb[0].mxu0
  %1204 = vdwg.mxu0
  %1205 = vrot.lane.b32.xlu0 %v718, 104
  %v1206 = vpop.permute.xlu0 %1205
  %1207 = vrot.lane.b32.xlu0 %v717, 104
  %v1208 = vpop.permute.xlu0 %1207
  %v1209 = vsel %vm18, %v1206, 0
  %v1211 = vsel %vm18, %v1208, 0
  %1213 = vmatprep.subr.mxu0 0.0
  %1214 = vmatpush1.xpose.msra.mxu0 %v1211
  %1215 = vmatprep.subr.mxu0 0.0
  %1216 = vmatpush1.xpose.msra.mxu0 0.0
  %1217 = vmatprep.subr.mxu0 0.0
  %1218 = vmatpush1.xpose.msra.mxu0 0.0
  %1219 = vmatprep.subr.mxu0 0.0
  %1220 = vmatpush1.xpose.msra.mxu0 0.0
  %1221 = vmatprep.subr.mxu0 0.0
  %1222 = vmatpush1.xpose.msra.mxu0 0.0
  %1223 = vmatprep.subr.mxu0 0.0
  %1224 = vmatpush1.xpose.msra.mxu0 0.0
  %1225 = vmatprep.subr.mxu0 0.0
  %1226 = vmatpush1.xpose.msra.mxu0 0.0
  %1227 = vmatprep.subr.mxu0 0.0
  %1228 = vmatpush1.xpose.msra.mxu0 0.0
  %1229 = vmatprep.subr.mxu0 0.0
  %1230 = vmatpush1.xpose.msra.mxu0 0.0
  %1231 = vmatprep.subr.mxu0 0.0
  %1232 = vmatpush1.xpose.msra.mxu0 0.0
  %1233 = vmatprep.subr.mxu0 0.0
  %1234 = vmatpush1.xpose.msra.mxu0 0.0
  %1235 = vmatprep.subr.mxu0 0.0
  %1236 = vmatpush1.xpose.msra.mxu0 0.0
  %1237 = vmatprep.subr.mxu0 0.0
  %1238 = vmatpush1.xpose.msra.mxu0 0.0
  %1239 = vmatprep.subr.mxu0 0.0
  %1240 = vmatpush1.xpose.msra.mxu0 0.0
  %1241 = vmatprep.subr.mxu0 0.0
  %1242 = vmatpush1.xpose.msra.mxu0 0.0
  %1243 = vmatprep.subr.mxu0 0.0
  %1244 = vmatpush1.xpose.msra.mxu0 0.0
  %1245 = vmatprep.subr.mxu0 0.0
  %1246 = vmatpush1.xpose.msra.mxu0 0.0
  %1247 = vmatprep.subr.mxu0 0.0
  %1248 = vmatpush1.xpose.msra.mxu0 0.0
  %1249 = vmatprep.subr.mxu0 0.0
  %1250 = vmatpush1.xpose.msra.mxu0 0.0
  %1251 = vmatprep.subr.mxu0 0.0
  %1252 = vmatpush1.xpose.msra.mxu0 0.0
  %1253 = vmatprep.subr.mxu0 0.0
  %1254 = vmatpush1.xpose.msra.mxu0 0.0
  %1255 = vmatprep.subr.mxu0 0.0
  %1256 = vmatpush1.xpose.msra.mxu0 0.0
  %1257 = vmatprep.subr.mxu0 0.0
  %1258 = vmatpush1.xpose.msra.mxu0 0.0
  %1259 = vmatprep.subr.mxu0 0.0
  %1260 = vmatpush1.xpose.msra.mxu0 0.0
  %1261 = vmatprep.subr.mxu0 0.0
  %1262 = vmatpush1.xpose.msra.mxu0 0.0
  %1263 = vmatprep.subr.mxu0 0.0
  %1264 = vmatpush1.xpose.msra.mxu0 0.0
  %1265 = vmatprep.subr.mxu0 0.0
  %1266 = vmatpush1.xpose.msra.mxu0 0.0
  %1267 = vmatprep.subr.mxu0 0.0
  %1268 = vmatpush1.xpose.msra.mxu0 0.0
  %1269 = vmatprep.subr.mxu0 0.0
  %1270 = vmatpush1.xpose.msra.mxu0 0.0
  %1271 = vmatprep.subr.mxu0 0.0
  %1272 = vmatpush1.xpose.msra.mxu0 0.0
  %1273 = vmatprep.subr.mxu0 0.0
  %1274 = vmatpush1.xpose.msra.mxu0 0.0
  %1275 = vmatprep.subr.mxu0 0.0
  %1276 = vmatpush1.xpose.msra.mxu0 0.0
  %1277 = vmatprep.mubr.f32.mxu0 0.0
  %1278 = vmatmul.mubr.f32.gmra.mrb[0].mxu0 %v1209
  %v1279 = vpop.f32.mrb[0].mxu0
  %v1280 = vadd.f32 0.0, %v1279
  %v1281 = vpop.f32.mrb[0].mxu0
  %1282 = vdwg.mxu0
  %v1283 = vsel %vm18, %v1280, -inf
  %1284 = vmax.xlane.f32.xlu0 %v1283
  %v1285 = vpop.xlane.xlu0 %1284
  %v1286 = vsub.f32 %v1280, %v1285
  %v1287 = vmul.f32 %v1286, 1.442695
  %v1288 = vpow.pop %v1287
  %v1289 = vsel %vm18, %v1288, 0.0
  %1290 = vadd.xlane.f32.xlu0 %v1289
  %v1291 = vpop.xlane.xlu0 %1290
  %v1292 = vrcp.pop %v1291
  %v1293 = vmul.f32 %v1288, %v1292
  %v1296 = vsel %vm18, %v1293, 0
  %1298 = vmatprep.subr.mxu0 0.0
  %1299 = vmatpush1.msra.mxu0 %v1208
  %1300 = vmatprep.subr.mxu0 0.0
  %1301 = vmatpush1.msra.mxu0 0.0
  %1302 = vmatprep.subr.mxu0 0.0
  %1303 = vmatpush1.msra.mxu0 0.0
  %1304 = vmatprep.subr.mxu0 0.0
  %1305 = vmatpush1.msra.mxu0 0.0
  %1306 = vmatprep.subr.mxu0 0.0
  %1307 = vmatpush1.msra.mxu0 0.0
  %1308 = vmatprep.subr.mxu0 0.0
  %1309 = vmatpush1.msra.mxu0 0.0
  %1310 = vmatprep.subr.mxu0 0.0
  %1311 = vmatpush1.msra.mxu0 0.0
  %1312 = vmatprep.subr.mxu0 0.0
  %1313 = vmatpush1.msra.mxu0 0.0
  %1314 = vmatprep.subr.mxu0 0.0
  %1315 = vmatpush1.msra.mxu0 0.0
  %1316 = vmatprep.subr.mxu0 0.0
  %1317 = vmatpush1.msra.mxu0 0.0
  %1318 = vmatprep.subr.mxu0 0.0
  %1319 = vmatpush1.msra.mxu0 0.0
  %1320 = vmatprep.subr.mxu0 0.0
  %1321 = vmatpush1.msra.mxu0 0.0
  %1322 = vmatprep.subr.mxu0 0.0
  %1323 = vmatpush1.msra.mxu0 0.0
  %1324 = vmatprep.subr.mxu0 0.0
  %1325 = vmatpush1.msra.mxu0 0.0
  %1326 = vmatprep.subr.mxu0 0.0
  %1327 = vmatpush1.msra.mxu0 0.0
  %1328 = vmatprep.subr.mxu0 0.0
  %1329 = vmatpush1.msra.mxu0 0.0
  %1330 = vmatprep.subr.mxu0 0.0
  %1331 = vmatpush1.msra.mxu0 0.0
  %1332 = vmatprep.subr.mxu0 0.0
  %1333 = vmatpush1.msra.mxu0 0.0
  %1334 = vmatprep.subr.mxu0 0.0
  %1335 = vmatpush1.msra.mxu0 0.0
  %1336 = vmatprep.subr.mxu0 0.0
  %1337 = vmatpush1.msra.mxu0 0.0
  %1338 = vmatprep.subr.mxu0 0.0
  %1339 = vmatpush1.msra.mxu0 0.0
  %1340 = vmatprep.subr.mxu0 0.0
  %1341 = vmatpush1.msra.mxu0 0.0
  %1342 = vmatprep.subr.mxu0 0.0
  %1343 = vmatpush1.msra.mxu0 0.0
  %1344 = vmatprep.subr.mxu0 0.0
  %1345 = vmatpush1.msra.mxu0 0.0
  %1346 = vmatprep.subr.mxu0 0.0
  %1347 = vmatpush1.msra.mxu0 0.0
  %1348 = vmatprep.subr.mxu0 0.0
  %1349 = vmatpush1.msra.mxu0 0.0
  %1350 = vmatprep.subr.mxu0 0.0
  %1351 = vmatpush1.msra.mxu0 0.0
  %1352 = vmatprep.subr.mxu0 0.0
  %1353 = vmatpush1.msra.mxu0 0.0
  %1354 = vmatprep.subr.mxu0 0.0
  %1355 = vmatpush1.msra.mxu0 0.0
  %1356 = vmatprep.subr.mxu0 0.0
  %1357 = vmatpush1.msra.mxu0 0.0
  %1358 = vmatprep.subr.mxu0 0.0
  %1359 = vmatpush1.msra.mxu0 0.0
  %1360 = vmatprep.subr.mxu0 0.0
  %1361 = vmatpush1.msra.mxu0 0.0
  %1362 = vmatprep.mubr.f32.mxu0 0.0
  %1363 = vmatmul.mubr.f32.gmra.mrb[0].mxu0 %v1296
  %v1364 = vpop.f32.mrb[0].mxu0
  %v1365 = vadd.f32 0.0, %v1364
  %v1366 = vpop.f32.mrb[0].mxu0
  %1367 = vdwg.mxu0
  %1369 = vrot.lane.b32.xlu0 %v1039, 8
  %v1370 = vpop.permute.xlu0 %1369
  %1373 = vrot.lane.b32.xlu0 %v1202, 16
  %v1374 = vpop.permute.xlu0 %1373
  %1377 = vrot.lane.b32.xlu0 %v1365, 24
  %v1378 = vpop.permute.xlu0 %1377
  %v1380 = vsel %vm18, %v876, %v1370
  %v1381 = vsel %vm681, %v1380, %v1374
  %v1382 = vsel %vm683, %v1381, %v1378
  %v1383 = vadd.f32 %v717, %v1382
  %v1384 = vsel %vm686, %v1383, 0.0
  %1385 = vadd.xlane.f32.xlu0 %v1384
  %v1386 = vpop.xlane.xlu0 %1385
  %v1387 = vmul.f32 %v1386, %v690
  %v1388 = vsub.f32 %v1383, %v1387
  %v1389 = vmul.f32 %v1388, %v1388
  %v1390 = vsel %vm686, %v1389, 0.0
  %1391 = vadd.xlane.f32.xlu0 %v1390
  %v1392 = vpop.xlane.xlu0 %1391
  %v1393 = vmul.f32 %v1392, %v690
  %v1394 = vadd.f32 %v1393, 1e-05
  %v1395 = vrsqrt.pop %v1394
  %v1396 = vmul.f32 %v1388, %v1395
  %v1397 = vmul.f32 %v1396, %v705
  %v1398 = vadd.f32 %v1397, %v712
  %s1399 = scalar_lea.vmem %s3, 8
  %1400 = vst.msk [vmem:[%s1399] sm:$0xff] %vm686, %v1398
  // Predicated region
  $region14: #{no_affine_encoder_layer.1} parent=0 // pred_check
    _
  $region15: #{no_affine_encoder_layer.1} parent=0 // pred_check_branch
    %1402 = sbr.rel (0) target = $region17
  $region16: #{no_affine_encoder_layer.1} parent=0 // pred_region
    _
  $region17: #{no_affine_encoder_layer.1} parent=0 // pred_fallthru
    _
  // Predicated region
  $region18: #{no_affine_encoder_layer.1} parent=0 // pred_check
    _
  $region19: #{no_affine_encoder_layer.1} parent=0 // pred_check_branch
    %1404 = sbr.rel (0) target = $region21
  $region20: #{no_affine_encoder_layer.1} parent=0 // pred_region
    _
  $region21: #{no_affine_encoder_layer.1} parent=0 // pred_fallthru
    _

</llo_original>
